<compile_context>
chip_gen: v7x
topology: tpu7x:2x2x1
jax: 0.10.0
libtpu: 0.0.40
codegen_flags: <defaults>
</compile_context>

<pallas_src>
import jax
import jax.numpy as jnp
from jax.experimental import pallas as pl
from jax.experimental.pallas import tpu as pltpu

Ks = (2, 3, 4)   # conv kernel widths
Kmax = max(Ks)
Co = 128         # conv output channels
C = 3            # number of classes


def gated_cnn_kernel(x_ref, tgt_ref, w_all_ref, b1_ref, b2_ref, mask_ref,
                     w_asp_ref, b_asp_ref, w_fc1_ref, b_fc1_ref, out_ref):
    Bt = x_ref.shape[0]                      # batch tile
    T_pad = x_ref.shape[1]                   # padded time axis
    KD = x_ref.shape[2]                      # Kmax * D
    nK = len(Ks)

    # fc_aspect(targets): (Bt, Co)
    aspect = jnp.dot(tgt_ref[...], w_asp_ref[...],
                     preferred_element_type=jnp.float32) + b_asp_ref[...]

    # Shared im2col LHS for all branches (bf16).
    x2d = x_ref[...].reshape(Bt * T_pad, KD)

    pooled = []
    for j, K in enumerate(Ks):
        # N-split per branch: (Bt*T_pad, KD) @ (KD, 2*Co) -> f32.  Same MXU column
        # passes as the fused 6*Co dot, but ~3x less live f32 (less vreg spill) and
        # this branch's VPU/EUP work overlaps the next branch's MXU push.
        w_j = w_all_ref[:, (2 * j) * Co:(2 * j + 2) * Co]            # (KD, 2*Co)
        conv_j = jnp.dot(x2d, w_j, preferred_element_type=jnp.float32)
        conv_j = conv_j.reshape(Bt, T_pad, 2 * Co)

        a1 = conv_j[:, :, :Co]                                       # tanh branch
        a2 = conv_j[:, :, Co:]                                       # gate branch
        b1_j = b1_ref[j:j + 1, :]                                    # (1, Co)
        gate_bias = aspect + b2_ref[j:j + 1, :]                      # (Bt, Co), fused once

        # TODO(synk): on v6e/v7x the tanh/relu/mul below could run in bf16 (native
        # VPU/EUP bf16) for ~2x EUP throughput; kept f32 so v5e stays correct/fast.
        x = jnp.tanh(a1 + b1_j)
        y = jnp.maximum(a2 + gate_bias[:, None, :], 0.0)
        g = x * y
        # Static additive tail mask: 0 where t < L - K + 1, -1e30 otherwise.
        g = g + mask_ref[j]                                          # (T_pad,1) bcast
        pooled.append(jnp.max(g, axis=1))                            # (Bt, Co)

    feats = jnp.concatenate(pooled, axis=-1)                         # (Bt, 3*Co)
    logits = jnp.dot(feats, w_fc1_ref[...],
                     preferred_element_type=jnp.float32) + b_fc1_ref[...]   # (Bt, C)

    # log_softmax over classes (C=3 -> negligible either way)
    m = jnp.max(logits, axis=-1, keepdims=True)
    z = logits - m
    lse = jnp.log(jnp.sum(jnp.exp(z), axis=-1, keepdims=True))
    out_ref[...] = (z - lse).astype(out_ref.dtype)


def gated_cnn_scores(sents, target, params, *, batch_tile=None):
    """Runs compute_score (eval mode) as a single Pallas kernel. Returns (B, C) log-probs."""
    B, L, D = sents.shape
    KD = Kmax * D
    nK = len(Ks)

    # ---- wrapper-side layout plumbing (free vs. in-kernel XLU work) ----
    T = L - min(Ks) + 1                        # largest Lout over branches (= L - 1)
    T_pad = ((T + 15) // 16) * 16              # multiple of 16: bf16 packs 2 rows/sublane
    pad_t = T_pad + Kmax - 1 - L               # zero pad so every tap window is defined
    s_pad = jnp.pad(sents, ((0, 0), (0, pad_t), (0, 0)))
    # im2col slab: X[b, t, k*D:(k+1)*D] = s_pad[b, t+k, :]
    # TODO(synk): at production B*L this 4x slab is an extra HBM write+read before the
    # kernel; if measured HBM-bound, build the Kmax tap views in-kernel from a single
    # (B, L_pad, D) input via pl.ds sublane-shifted slices feeding 4 accumulated dots.
    X = jnp.concatenate([s_pad[:, k:k + T_pad, :] for k in range(Kmax)],
                        axis=-1).astype(jnp.bfloat16)        # (B, T_pad, Kmax*D)

    # Fused conv weights: per branch pad taps to Kmax with zeros, stack [w1 | w2],
    # concat over K -> (Kmax*D, 6*Co).  Depth stays 128 (one MXU depth tile), so the
    # zero taps cost no MXU time; the kernel splits along N per branch.
    w_blocks = []
    for K in Ks:
        p = params[f'conv{K}']
        for w in (p['w1'], p['w2']):                          # (K, D, Co)
            w_full = jnp.pad(w, ((0, Kmax - K), (0, 0), (0, 0)))
            w_blocks.append(w_full.reshape(KD, Co))
    W_all = jnp.concatenate(w_blocks, axis=-1).astype(jnp.bfloat16)   # (KD, 6*Co)

    b1_all = jnp.concatenate([params[f'conv{K}']['b1'] for K in Ks], axis=0)  # (3, Co)
    b2_all = jnp.concatenate([params[f'conv{K}']['b2'] for K in Ks], axis=0)  # (3, Co)

    # Static additive tail mask per branch: 0 where the window is valid (t < L-K+1),
    # -1e30 otherwise.  Replaces in-kernel iota + cmp + select.
    t = jnp.arange(T_pad)
    tail_mask = jnp.stack(
        [jnp.where(t < (L - K + 1), 0.0, -1e30).astype(jnp.float32) for K in Ks],
        axis=0)[:, :, None]                                   # (nK, T_pad, 1)

    if batch_tile is None:
        # For real batches, split into >=2 grid steps (multiple of 16 so the bf16
        # (batch_tile, T_pad, KD) block keeps clean sublane packing); the "parallel"
        # annotation then shards steps across v7x's two TensorCores.  At toy sizes a
        # single step avoids per-step overhead.
        if B >= 32 and (B // 2) % 16 == 0:
            batch_tile = B // 2
        else:
            batch_tile = B
    assert B % batch_tile == 0
    grid = (B // batch_tile,)

    # Scoped-VMEM budget: double-buffered X block + resident W_all + live f32 per-branch
    # conv result.  Raise above v5e's 16 MiB scoped default; stay below v7x's 64 MiB
    # physical VMEM.
    vmem_needed = (2 * batch_tile * T_pad * KD * 2          # X (bf16, double-buffered)
                   + KD * 2 * nK * Co * 2                    # W_all (bf16)
                   + 2 * batch_tile * T_pad * 2 * Co * 4     # live f32 conv_j (+slack)
                   + (1 << 20))
    vmem_limit = int(min(max(2 * vmem_needed, 32 << 20), 48 << 20))

    def full(shape):
        return pl.BlockSpec(shape, lambda i, _s=shape: (0,) * len(_s))

    return pl.pallas_call(
        gated_cnn_kernel,
        out_shape=jax.ShapeDtypeStruct((B, C), jnp.float32),
        grid=grid,
        in_specs=[
            pl.BlockSpec((batch_tile, T_pad, KD), lambda i: (i, 0, 0)),   # X
            pl.BlockSpec((batch_tile, D), lambda i: (i, 0)),              # target
            full((KD, 2 * nK * Co)),                                      # W_all
            full((nK, Co)),                                               # b1_all
            full((nK, Co)),                                               # b2_all
            full((nK, T_pad, 1)),                                         # tail_mask
            full((D, Co)),                                                # w_asp
            full((1, Co)),                                                # b_asp
            full((nK * Co, C)),                                           # w_fc1
            full((1, C)),                                                 # b_fc1
        ],
        out_specs=pl.BlockSpec((batch_tile, C), lambda i: (i, 0)),
        compiler_params=pltpu.CompilerParams(
            dimension_semantics=("parallel",),
            vmem_limit_bytes=vmem_limit),
    )(X, target, W_all, b1_all, b2_all, tail_mask,
      params['w_asp'], params['b_asp'], params['w_fc1'], params['b_fc1'])


def forward(sents, target, label, lens, params):
    """Mirrors CNN_Gate_Aspect_Text.forward in eval mode: returns (nll_loss, scores)."""
    del lens  # lens == L for every sentence -> pack/unpack is identity (see header note)
    # TODO(synk): if real data has lens < L, extend tail_mask to also mask positions
    # t >= lens[b] (same additive -1e30 mechanism) before the max-pool.
    scores = gated_cnn_scores(sents, target, params)
    nll = -jnp.take_along_axis(scores, label[:, None], axis=1)[:, 0]
    return jnp.mean(nll), scores


def init_params(key, D):
    """Deterministic synthetic parameters matching the module's shapes."""
    def u(k, shape, scale):
        return jax.random.uniform(k, shape, jnp.float32, -scale, scale)

    params = {}
    keys = jax.random.split(key, 4 * len(Ks) + 4)
    i = 0
    for K in Ks:
        bound = 1.0 / float(jnp.sqrt(D * K))   # Conv1d default-style bound
        params[f'conv{K}'] = {
            'w1': u(keys[i + 0], (K, D, Co), bound),   # = PyTorch W[co, d, k] transposed to (k, d, co)
            'b1': u(keys[i + 1], (1, Co), bound),
            'w2': u(keys[i + 2], (K, D, Co), bound),
            'b2': u(keys[i + 3], (1, Co), bound),
        }
        i += 4
    params['w_asp'] = u(keys[i + 0], (D, Co), 1.0 / float(jnp.sqrt(D)))
    params['b_asp'] = u(keys[i + 1], (1, Co), 1.0 / float(jnp.sqrt(D)))
    params['w_fc1'] = u(keys[i + 2], (len(Ks) * Co, C), 1.0 / float(jnp.sqrt(len(Ks) * Co)))
    params['b_fc1'] = u(keys[i + 3], (1, C), 1.0 / float(jnp.sqrt(len(Ks) * Co)))
    return params


def reference_scores(sents, target, params):
    """Pure-JAX reference. Conv inputs are rounded through bf16 to mirror the kernel's
    bf16-matmul-inputs / f32-accumulation choice; everything else is f32."""
    with jax.default_matmul_precision('highest'):
        sents_q = sents.astype(jnp.bfloat16).astype(jnp.float32)
        aspect = jnp.dot(target, params['w_asp']) + params['b_asp']
        L = sents.shape[1]
        pooled = []
        for K in Ks:
            p = params[f'conv{K}']
            w1 = p['w1'].astype(jnp.bfloat16).astype(jnp.float32)
            w2 = p['w2'].astype(jnp.bfloat16).astype(jnp.float32)
            Lout = L - K + 1
            acc1 = sum(jnp.einsum('bld,dc->blc', sents_q[:, k:k + Lout, :], w1[k])
                       for k in range(K))
            acc2 = sum(jnp.einsum('bld,dc->blc', sents_q[:, k:k + Lout, :], w2[k])
                       for k in range(K))
            x = jnp.tanh(acc1 + p['b1'])
            y = jax.nn.relu(acc2 + p['b2'] + aspect[:, None, :])
            pooled.append(jnp.max(x * y, axis=1))
        logits = jnp.dot(jnp.concatenate(pooled, -1), params['w_fc1']) + params['b_fc1']
        return jax.nn.log_softmax(logits, axis=-1)


if __name__ == "__main__":
    B, L, D = 4, 16, 32   # batch, sentence length, embed_dim

    key = jax.random.PRNGKey(0)
    k_sent, k_tgt, k_par = jax.random.split(key, 3)
    sents = jax.random.normal(k_sent, (B, L, D), jnp.float32)    # batch_size * max_len * emb_dim
    target = jax.random.normal(k_tgt, (B, D), jnp.float32)       # batch_size * emb_dim
    label = jnp.array([0, 1, 2, 0], dtype=jnp.int32)
    lens = jnp.full((B,), L, dtype=jnp.int32)

    params = init_params(k_par, D)

    loss, scores = jax.jit(forward)(sents, target, label, lens, params)
    jax.block_until_ready((loss, scores))

    ref = reference_scores(sents, target, params)
    assert jnp.allclose(scores, ref, atol=5e-3, rtol=5e-3), "Pallas kernel mismatch vs reference"
    assert scores.shape == (B, C) and loss.shape == ()
    assert bool(jnp.isfinite(loss))

    # TODO(synk): training-mode dropout (p=0.5 on embeddings, 0.2 on sents_vec) is not
    # implemented; this kernel reproduces the eval-mode forward + NLL loss.
    print("KERNEL_OK")
</pallas_src>

<mosaic_0001>
module attributes {stable_mosaic.version = 11 : i64} {
  func.func @gated_cnn_kernel(%arg0: i32, %arg1: memref<4x16x128xbf16, #tpu.memory_space<vmem>>, %arg2: memref<4x32xf32, #tpu.memory_space<vmem>>, %arg3: memref<128x768xbf16, #tpu.memory_space<vmem>>, %arg4: memref<3x128xf32, #tpu.memory_space<vmem>>, %arg5: memref<3x128xf32, #tpu.memory_space<vmem>>, %arg6: memref<3x16x1xf32, #tpu.memory_space<vmem>>, %arg7: memref<32x128xf32, #tpu.memory_space<vmem>>, %arg8: memref<1x128xf32, #tpu.memory_space<vmem>>, %arg9: memref<384x3xf32, #tpu.memory_space<vmem>>, %arg10: memref<1x3xf32, #tpu.memory_space<vmem>>, %arg11: memref<4x3xf32, #tpu.memory_space<vmem>>) attributes {dimension_semantics = [#tpu.dimension_semantics<parallel>], iteration_bounds = array<i64: 1>, scalar_prefetch = 0 : i64, scratch_operands = 0 : i64, tpu.core_type = #tpu.core_type<tc>, window_params = [{transform_indices = @transform_0, window_bounds = array<i64: 4, 16, 128>}, {transform_indices = @transform_1, window_bounds = array<i64: 4, 32>}, {pipeline_mode = #tpu.pipeline_mode<synchronous>, transform_indices = @transform_2, window_bounds = array<i64: 128, 768>}, {pipeline_mode = #tpu.pipeline_mode<synchronous>, transform_indices = @transform_3, window_bounds = array<i64: 3, 128>}, {pipeline_mode = #tpu.pipeline_mode<synchronous>, transform_indices = @transform_4, window_bounds = array<i64: 3, 128>}, {pipeline_mode = #tpu.pipeline_mode<synchronous>, transform_indices = @transform_5, window_bounds = array<i64: 3, 16, 1>}, {pipeline_mode = #tpu.pipeline_mode<synchronous>, transform_indices = @transform_6, window_bounds = array<i64: 32, 128>}, {pipeline_mode = #tpu.pipeline_mode<synchronous>, transform_indices = @transform_7, window_bounds = array<i64: 1, 128>}, {pipeline_mode = #tpu.pipeline_mode<synchronous>, transform_indices = @transform_8, window_bounds = array<i64: 384, 3>}, {pipeline_mode = #tpu.pipeline_mode<synchronous>, transform_indices = @transform_9, window_bounds = array<i64: 1, 3>}, {transform_indices = @transform_10, window_bounds = array<i64: 4, 3>}]} {
    %c0 = arith.constant 0 : index
    %c0_0 = arith.constant 0 : index
    %0 = vector.load %arg2[%c0, %c0_0] : memref<4x32xf32, #tpu.memory_space<vmem>>, vector<4x32xf32>
    %c0_1 = arith.constant 0 : index
    %c0_2 = arith.constant 0 : index
    %1 = vector.load %arg7[%c0_1, %c0_2] : memref<32x128xf32, #tpu.memory_space<vmem>>, vector<32x128xf32>
    %cst = arith.constant dense<0.000000e+00> : vector<4x128xf32>
    %2 = tpu.matmul %0, %1, %cst {dimension_numbers = #tpu.dot_dimension_numbers<[1], [0], [0], [1], [0, 0, 1, 1], [], []>} : vector<4x32xf32>, vector<32x128xf32>, vector<4x128xf32> -> vector<4x128xf32>
    %c0_3 = arith.constant 0 : index
    %c0_4 = arith.constant 0 : index
    %3 = vector.load %arg8[%c0_3, %c0_4] : memref<1x128xf32, #tpu.memory_space<vmem>>, vector<1x128xf32>
    %4 = vector.broadcast %3 : vector<1x128xf32> to vector<4x128xf32>
    %5 = arith.addf %2, %4 : vector<4x128xf32>
    %c0_5 = arith.constant 0 : index
    %c0_6 = arith.constant 0 : index
    %c0_7 = arith.constant 0 : index
    %6 = vector.load %arg1[%c0_5, %c0_6, %c0_7] : memref<4x16x128xbf16, #tpu.memory_space<vmem>>, vector<4x16x128xbf16>
    %7 = vector.shape_cast %6 : vector<4x16x128xbf16> to vector<64x128xbf16>
    %c0_8 = arith.constant 0 : index
    %c0_9 = arith.constant 0 : index
    %8 = vector.load %arg3[%c0_8, %c0_9] : memref<128x768xbf16, #tpu.memory_space<vmem>>, vector<128x256xbf16>
    %cst_10 = arith.constant dense<0.000000e+00> : vector<64x256xf32>
    %9 = tpu.matmul %7, %8, %cst_10 {dimension_numbers = #tpu.dot_dimension_numbers<[1], [0], [0], [1], [0, 0, 1, 1], [], []>} : vector<64x128xbf16>, vector<128x256xbf16>, vector<64x256xf32> -> vector<64x256xf32>
    %10 = vector.shape_cast %9 : vector<64x256xf32> to vector<4x16x256xf32>
    %11 = vector.extract_strided_slice %10 {offsets = [0, 0, 0], sizes = [4, 16, 128], strides = [1, 1, 1]} : vector<4x16x256xf32> to vector<4x16x128xf32>
    %12 = vector.extract_strided_slice %10 {offsets = [0, 0, 128], sizes = [4, 16, 128], strides = [1, 1, 1]} : vector<4x16x256xf32> to vector<4x16x128xf32>
    %c0_11 = arith.constant 0 : index
    %c0_12 = arith.constant 0 : index
    %13 = vector.load %arg4[%c0_11, %c0_12] : memref<3x128xf32, #tpu.memory_space<vmem>>, vector<1x128xf32>
    %c0_13 = arith.constant 0 : index
    %c0_14 = arith.constant 0 : index
    %14 = vector.load %arg5[%c0_13, %c0_14] : memref<3x128xf32, #tpu.memory_space<vmem>>, vector<1x128xf32>
    %15 = vector.broadcast %14 : vector<1x128xf32> to vector<4x128xf32>
    %16 = arith.addf %5, %15 : vector<4x128xf32>
    %17 = vector.shape_cast %13 : vector<1x128xf32> to vector<1x1x128xf32>
    %18 = vector.broadcast %17 : vector<1x1x128xf32> to vector<4x16x128xf32>
    %19 = arith.addf %11, %18 : vector<4x16x128xf32>
    %20 = math.tanh %19 : vector<4x16x128xf32>
    %21 = vector.shape_cast %16 : vector<4x128xf32> to vector<4x1x128xf32>
    %22 = vector.broadcast %21 : vector<4x1x128xf32> to vector<4x16x128xf32>
    %23 = arith.addf %12, %22 : vector<4x16x128xf32>
    %cst_15 = arith.constant 0.000000e+00 : f32
    %24 = vector.broadcast %cst_15 : f32 to vector<4x16x128xf32>
    %25 = arith.maximumf %23, %24 : vector<4x16x128xf32>
    %26 = arith.mulf %20, %25 : vector<4x16x128xf32>
    %c0_16 = arith.constant 0 : index
    %c0_17 = arith.constant 0 : index
    %c0_18 = arith.constant 0 : index
    %27 = vector.load %arg6[%c0_16, %c0_17, %c0_18] : memref<3x16x1xf32, #tpu.memory_space<vmem>>, vector<1x16x1xf32>
    %28 = vector.shape_cast %27 : vector<1x16x1xf32> to vector<16x1xf32>
    %29 = vector.shape_cast %28 : vector<16x1xf32> to vector<1x16x1xf32>
    %30 = vector.broadcast %29 : vector<1x16x1xf32> to vector<4x16x128xf32>
    %31 = arith.addf %26, %30 : vector<4x16x128xf32>
    %cst_19 = arith.constant dense<0xFF800000> : vector<4x128xf32>
    %32 = vector.multi_reduction <maximumf>, %31, %cst_19 [1] : vector<4x16x128xf32> to vector<4x128xf32>
    %c0_20 = arith.constant 0 : index
    %c256 = arith.constant 256 : index
    %33 = vector.load %arg3[%c0_20, %c256] : memref<128x768xbf16, #tpu.memory_space<vmem>>, vector<128x256xbf16>
    %cst_21 = arith.constant dense<0.000000e+00> : vector<64x256xf32>
    %34 = tpu.matmul %7, %33, %cst_21 {dimension_numbers = #tpu.dot_dimension_numbers<[1], [0], [0], [1], [0, 0, 1, 1], [], []>} : vector<64x128xbf16>, vector<128x256xbf16>, vector<64x256xf32> -> vector<64x256xf32>
    %35 = vector.shape_cast %34 : vector<64x256xf32> to vector<4x16x256xf32>
    %36 = vector.extract_strided_slice %35 {offsets = [0, 0, 0], sizes = [4, 16, 128], strides = [1, 1, 1]} : vector<4x16x256xf32> to vector<4x16x128xf32>
    %37 = vector.extract_strided_slice %35 {offsets = [0, 0, 128], sizes = [4, 16, 128], strides = [1, 1, 1]} : vector<4x16x256xf32> to vector<4x16x128xf32>
    %c1 = arith.constant 1 : index
    %c0_22 = arith.constant 0 : index
    %38 = vector.load %arg4[%c1, %c0_22] : memref<3x128xf32, #tpu.memory_space<vmem>>, vector<1x128xf32>
    %c1_23 = arith.constant 1 : index
    %c0_24 = arith.constant 0 : index
    %39 = vector.load %arg5[%c1_23, %c0_24] : memref<3x128xf32, #tpu.memory_space<vmem>>, vector<1x128xf32>
    %40 = vector.broadcast %39 : vector<1x128xf32> to vector<4x128xf32>
    %41 = arith.addf %5, %40 : vector<4x128xf32>
    %42 = vector.shape_cast %38 : vector<1x128xf32> to vector<1x1x128xf32>
    %43 = vector.broadcast %42 : vector<1x1x128xf32> to vector<4x16x128xf32>
    %44 = arith.addf %36, %43 : vector<4x16x128xf32>
    %45 = math.tanh %44 : vector<4x16x128xf32>
    %46 = vector.shape_cast %41 : vector<4x128xf32> to vector<4x1x128xf32>
    %47 = vector.broadcast %46 : vector<4x1x128xf32> to vector<4x16x128xf32>
    %48 = arith.addf %37, %47 : vector<4x16x128xf32>
    %cst_25 = arith.constant 0.000000e+00 : f32
    %49 = vector.broadcast %cst_25 : f32 to vector<4x16x128xf32>
    %50 = arith.maximumf %48, %49 : vector<4x16x128xf32>
    %51 = arith.mulf %45, %50 : vector<4x16x128xf32>
    %c1_26 = arith.constant 1 : index
    %c0_27 = arith.constant 0 : index
    %c0_28 = arith.constant 0 : index
    %52 = vector.load %arg6[%c1_26, %c0_27, %c0_28] : memref<3x16x1xf32, #tpu.memory_space<vmem>>, vector<1x16x1xf32>
    %53 = vector.shape_cast %52 : vector<1x16x1xf32> to vector<16x1xf32>
    %54 = vector.shape_cast %53 : vector<16x1xf32> to vector<1x16x1xf32>
    %55 = vector.broadcast %54 : vector<1x16x1xf32> to vector<4x16x128xf32>
    %56 = arith.addf %51, %55 : vector<4x16x128xf32>
    %cst_29 = arith.constant dense<0xFF800000> : vector<4x128xf32>
    %57 = vector.multi_reduction <maximumf>, %56, %cst_29 [1] : vector<4x16x128xf32> to vector<4x128xf32>
    %c0_30 = arith.constant 0 : index
    %c512 = arith.constant 512 : index
    %58 = vector.load %arg3[%c0_30, %c512] : memref<128x768xbf16, #tpu.memory_space<vmem>>, vector<128x256xbf16>
    %cst_31 = arith.constant dense<0.000000e+00> : vector<64x256xf32>
    %59 = tpu.matmul %7, %58, %cst_31 {dimension_numbers = #tpu.dot_dimension_numbers<[1], [0], [0], [1], [0, 0, 1, 1], [], []>} : vector<64x128xbf16>, vector<128x256xbf16>, vector<64x256xf32> -> vector<64x256xf32>
    %60 = vector.shape_cast %59 : vector<64x256xf32> to vector<4x16x256xf32>
    %61 = vector.extract_strided_slice %60 {offsets = [0, 0, 0], sizes = [4, 16, 128], strides = [1, 1, 1]} : vector<4x16x256xf32> to vector<4x16x128xf32>
    %62 = vector.extract_strided_slice %60 {offsets = [0, 0, 128], sizes = [4, 16, 128], strides = [1, 1, 1]} : vector<4x16x256xf32> to vector<4x16x128xf32>
    %c2 = arith.constant 2 : index
    %c0_32 = arith.constant 0 : index
    %63 = vector.load %arg4[%c2, %c0_32] : memref<3x128xf32, #tpu.memory_space<vmem>>, vector<1x128xf32>
    %c2_33 = arith.constant 2 : index
    %c0_34 = arith.constant 0 : index
    %64 = vector.load %arg5[%c2_33, %c0_34] : memref<3x128xf32, #tpu.memory_space<vmem>>, vector<1x128xf32>
    %65 = vector.broadcast %64 : vector<1x128xf32> to vector<4x128xf32>
    %66 = arith.addf %5, %65 : vector<4x128xf32>
    %67 = vector.shape_cast %63 : vector<1x128xf32> to vector<1x1x128xf32>
    %68 = vector.broadcast %67 : vector<1x1x128xf32> to vector<4x16x128xf32>
    %69 = arith.addf %61, %68 : vector<4x16x128xf32>
    %70 = math.tanh %69 : vector<4x16x128xf32>
    %71 = vector.shape_cast %66 : vector<4x128xf32> to vector<4x1x128xf32>
    %72 = vector.broadcast %71 : vector<4x1x128xf32> to vector<4x16x128xf32>
    %73 = arith.addf %62, %72 : vector<4x16x128xf32>
    %cst_35 = arith.constant 0.000000e+00 : f32
    %74 = vector.broadcast %cst_35 : f32 to vector<4x16x128xf32>
    %75 = arith.maximumf %73, %74 : vector<4x16x128xf32>
    %76 = arith.mulf %70, %75 : vector<4x16x128xf32>
    %c2_36 = arith.constant 2 : index
    %c0_37 = arith.constant 0 : index
    %c0_38 = arith.constant 0 : index
    %77 = vector.load %arg6[%c2_36, %c0_37, %c0_38] : memref<3x16x1xf32, #tpu.memory_space<vmem>>, vector<1x16x1xf32>
    %78 = vector.shape_cast %77 : vector<1x16x1xf32> to vector<16x1xf32>
    %79 = vector.shape_cast %78 : vector<16x1xf32> to vector<1x16x1xf32>
    %80 = vector.broadcast %79 : vector<1x16x1xf32> to vector<4x16x128xf32>
    %81 = arith.addf %76, %80 : vector<4x16x128xf32>
    %cst_39 = arith.constant dense<0xFF800000> : vector<4x128xf32>
    %82 = vector.multi_reduction <maximumf>, %81, %cst_39 [1] : vector<4x16x128xf32> to vector<4x128xf32>
    %83 = tpu.concatenate %32, %57, %82 in 1 : vector<4x128xf32>, vector<4x128xf32>, vector<4x128xf32> -> vector<4x384xf32>
    %c0_40 = arith.constant 0 : index
    %c0_41 = arith.constant 0 : index
    %84 = vector.load %arg9[%c0_40, %c0_41] : memref<384x3xf32, #tpu.memory_space<vmem>>, vector<384x3xf32>
    %cst_42 = arith.constant dense<0.000000e+00> : vector<4x3xf32>
    %85 = tpu.matmul %83, %84, %cst_42 {dimension_numbers = #tpu.dot_dimension_numbers<[1], [0], [0], [1], [0, 0, 1, 1], [], []>} : vector<4x384xf32>, vector<384x3xf32>, vector<4x3xf32> -> vector<4x3xf32>
    %c0_43 = arith.constant 0 : index
    %c0_44 = arith.constant 0 : index
    %86 = vector.load %arg10[%c0_43, %c0_44] : memref<1x3xf32, #tpu.memory_space<vmem>>, vector<1x3xf32>
    %87 = vector.broadcast %86 : vector<1x3xf32> to vector<4x3xf32>
    %88 = arith.addf %85, %87 : vector<4x3xf32>
    %cst_45 = arith.constant dense<0xFF800000> : vector<4xf32>
    %89 = vector.multi_reduction <maximumf>, %88, %cst_45 [1] : vector<4x3xf32> to vector<4xf32>
    %90 = vector.shape_cast %89 : vector<4xf32> to vector<4x1xf32>
    %91 = vector.broadcast %90 : vector<4x1xf32> to vector<4x3xf32>
    %92 = arith.subf %88, %91 : vector<4x3xf32>
    %93 = math.exp %92 : vector<4x3xf32>
    %cst_46 = arith.constant dense<0.000000e+00> : vector<4xf32>
    %94 = vector.multi_reduction <add>, %93, %cst_46 [1] : vector<4x3xf32> to vector<4xf32>
    %95 = vector.shape_cast %94 : vector<4xf32> to vector<4x1xf32>
    %96 = math.log %95 : vector<4x1xf32>
    %97 = vector.broadcast %96 : vector<4x1xf32> to vector<4x3xf32>
    %98 = arith.subf %92, %97 : vector<4x3xf32>
    %c0_47 = arith.constant 0 : index
    %c0_48 = arith.constant 0 : index
    %99 = vector.load %arg11[%c0_47, %c0_48] : memref<4x3xf32, #tpu.memory_space<vmem>>, vector<4x3xf32>
    tpu.vector_store %arg11[%c0_47, %c0_48], %98 {strides = array<i32>} : memref<4x3xf32, #tpu.memory_space<vmem>>, vector<4x3xf32>,
    return
  }
  func.func @transform_0(%arg0: i32) -> (i32, i32, i32) {
    %c0_i32 = arith.constant 0 : i32
    %c0_i32_0 = arith.constant 0 : i32
    %c0_i32_1 = arith.constant 0 : i32
    return %arg0, %c0_i32, %c0_i32_0 : i32, i32, i32
  }
  func.func @transform_1(%arg0: i32) -> (i32, i32) {
    %c0_i32 = arith.constant 0 : i32
    %c0_i32_0 = arith.constant 0 : i32
    return %arg0, %c0_i32 : i32, i32
  }
  func.func @transform_2(%arg0: i32) -> (i32, i32) {
    %c0_i32 = arith.constant 0 : i32
    %c0_i32_0 = arith.constant 0 : i32
    %c0_i32_1 = arith.constant 0 : i32
    return %c0_i32, %c0_i32_0 : i32, i32
  }
  func.func @transform_3(%arg0: i32) -> (i32, i32) {
    %c0_i32 = arith.constant 0 : i32
    %c0_i32_0 = arith.constant 0 : i32
    %c0_i32_1 = arith.constant 0 : i32
    return %c0_i32, %c0_i32_0 : i32, i32
  }
  func.func @transform_4(%arg0: i32) -> (i32, i32) {
    %c0_i32 = arith.constant 0 : i32
    %c0_i32_0 = arith.constant 0 : i32
    %c0_i32_1 = arith.constant 0 : i32
    return %c0_i32, %c0_i32_0 : i32, i32
  }
  func.func @transform_5(%arg0: i32) -> (i32, i32, i32) {
    %c0_i32 = arith.constant 0 : i32
    %c0_i32_0 = arith.constant 0 : i32
    %c0_i32_1 = arith.constant 0 : i32
    %c0_i32_2 = arith.constant 0 : i32
    return %c0_i32, %c0_i32_0, %c0_i32_1 : i32, i32, i32
  }
  func.func @transform_6(%arg0: i32) -> (i32, i32) {
    %c0_i32 = arith.constant 0 : i32
    %c0_i32_0 = arith.constant 0 : i32
    %c0_i32_1 = arith.constant 0 : i32
    return %c0_i32, %c0_i32_0 : i32, i32
  }
  func.func @transform_7(%arg0: i32) -> (i32, i32) {
    %c0_i32 = arith.constant 0 : i32
    %c0_i32_0 = arith.constant 0 : i32
    %c0_i32_1 = arith.constant 0 : i32
    return %c0_i32, %c0_i32_0 : i32, i32
  }
  func.func @transform_8(%arg0: i32) -> (i32, i32) {
    %c0_i32 = arith.constant 0 : i32
    %c0_i32_0 = arith.constant 0 : i32
    %c0_i32_1 = arith.constant 0 : i32
    return %c0_i32, %c0_i32_0 : i32, i32
  }
  func.func @transform_9(%arg0: i32) -> (i32, i32) {
    %c0_i32 = arith.constant 0 : i32
    %c0_i32_0 = arith.constant 0 : i32
    %c0_i32_1 = arith.constant 0 : i32
    return %c0_i32, %c0_i32_0 : i32, i32
  }
  func.func @transform_10(%arg0: i32) -> (i32, i32) {
    %c0_i32 = arith.constant 0 : i32
    %c0_i32_0 = arith.constant 0 : i32
    return %arg0, %c0_i32 : i32, i32
  }
}

</mosaic_0001>

<llo_original>
// kernel: forward.1
$region0: #{forward.1}
  #allocation0 [shape = 'u32[]', space=smem, size = 0x4, offset = 0x4, fixed_abs, tag = 'smem constant byte address 0x4 - core index']
  #allocation1 [shape = 'u32[144,128]{1,0:T(1,128)}', space=vmem, size = 0x12000, scoped, tag = 'internal scratch']
  %s0 = inlined_call_operand.vmem [shape: bf16[4,16,128], index: 0, kind: input, shape index: {}]
  %s1 = inlined_call_operand.vmem [shape: f32[4,32], index: 1, kind: input, shape index: {}]
  %s2 = inlined_call_operand.vmem [shape: bf16[128,768], index: 2, kind: input, shape index: {}]
  %s3 = inlined_call_operand.vmem [shape: f32[3,128], index: 3, kind: input, shape index: {}]
  %s4 = inlined_call_operand.vmem [shape: f32[3,128], index: 4, kind: input, shape index: {}]
  %s5 = inlined_call_operand.vmem [shape: f32[3,16,1], index: 5, kind: input, shape index: {}]
  %s6 = inlined_call_operand.vmem [shape: f32[32,128], index: 6, kind: input, shape index: {}]
  %s7 = inlined_call_operand.vmem [shape: f32[1,128], index: 7, kind: input, shape index: {}]
  %s8 = inlined_call_operand.vmem [shape: f32[384,3], index: 8, kind: input, shape index: {}]
  %s9 = inlined_call_operand.vmem [shape: f32[1,3], index: 9, kind: input, shape index: {}]
  %s10 = inlined_call_operand.vmem [shape: f32[4,3], index: 10, kind: output, shape index: {}]
  %s11 = sld [smem:[#allocation0]]
  $region50: #{forward.1} parent=0
    _
  %s13 = ssub.s32 1, %s11
  %s14 = scalar_select 0, %s13, %s11
  // Predicated region
  $region2: #{forward.1} parent=0 // pred_check
    _
  $region3: #{forward.1} parent=0 // pred_check_branch
    %16 = sbr.rel (0) target = $region5
  $region4: #{forward.1} parent=0 // pred_region
    _
  $region5: #{forward.1} parent=0 // pred_fallthru
    _
  // Predicated region
  $region6: #{forward.1} parent=0 // pred_check
    _
  $region7: #{forward.1} parent=0 // pred_check_branch
    %18 = sbr.rel (0) target = $region9
  $region8: #{forward.1} parent=0 // pred_region
    _
  $region9: #{forward.1} parent=0 // pred_fallthru
    _
  // Predicated region
  $region10: #{forward.1} parent=0 // pred_check
    _
  $region11: #{forward.1} parent=0 // pred_check_branch
    %20 = sbr.rel (0) target = $region13
  $region12: #{forward.1} parent=0 // pred_region
    _
  $region13: #{forward.1} parent=0 // pred_fallthru
    _
  // Predicated region
  $region14: #{forward.1} parent=0 // pred_check
    _
  $region15: #{forward.1} parent=0 // pred_check_branch
    %22 = sbr.rel (0) target = $region17
  $region16: #{forward.1} parent=0 // pred_region
    _
  $region17: #{forward.1} parent=0 // pred_fallthru
    _
  // Predicated region
  $region18: #{forward.1} parent=0 // pred_check
    _
  $region19: #{forward.1} parent=0 // pred_check_branch
    %24 = sbr.rel (0) target = $region21
  $region20: #{forward.1} parent=0 // pred_region
    _
  $region21: #{forward.1} parent=0 // pred_fallthru
    _
  // Predicated region
  $region22: #{forward.1} parent=0 // pred_check
    _
  $region23: #{forward.1} parent=0 // pred_check_branch
    %26 = sbr.rel (0) target = $region25
  $region24: #{forward.1} parent=0 // pred_region
    _
  $region25: #{forward.1} parent=0 // pred_fallthru
    _
  // Predicated region
  $region26: #{forward.1} parent=0 // pred_check
    _
  $region27: #{forward.1} parent=0 // pred_check_branch
    %28 = sbr.rel (0) target = $region29
  $region28: #{forward.1} parent=0 // pred_region
    _
  $region29: #{forward.1} parent=0 // pred_fallthru
    _
  // Predicated region
  $region30: #{forward.1} parent=0 // pred_check
    _
  $region31: #{forward.1} parent=0 // pred_check_branch
    %30 = sbr.rel (0) target = $region33
  $region32: #{forward.1} parent=0 // pred_region
    _
  $region33: #{forward.1} parent=0 // pred_fallthru
    _
  // Predicated region
  $region34: #{forward.1} parent=0 // pred_check
    _
  $region35: #{forward.1} parent=0 // pred_check_branch
    %32 = sbr.rel (0) target = $region37
  $region36: #{forward.1} parent=0 // pred_region
    _
  $region37: #{forward.1} parent=0 // pred_fallthru
    _
  // Predicated region
  $region38: #{forward.1} parent=0 // pred_check
    _
  $region39: #{forward.1} parent=0 // pred_check_branch
    %34 = sbr.rel (0) target = $region41
  $region40: #{forward.1} parent=0 // pred_region
    _
  $region41: #{forward.1} parent=0 // pred_fallthru
    _
  %v36 = vld [vmem:[%s1] sm:$0xf]
  %v37 = vld [vmem:[%s6] sm:$0xff]
  %v38 = vld [vmem:[%s6 + $0x8] sm:$0xff]
  %v39 = vld [vmem:[%s6 + $0x10] sm:$0xff]
  %v40 = vld [vmem:[%s6 + $0x18] sm:$0xff]
  %v41 = vld [vmem:[%s7] sm:$0x1]
  %v43 = vlaneseq
  %v44 = vshrl.u32 %v43, 7
  %v45 = vsub.s32 0, %v44
  %v46 = vrot.slane %v41, %v45
  %vm48 = vcmask 261120
  %v50 = vsel %vm48, %v36, 0
  %52 = vmatprep.subr.mxu0 0.0
  %53 = vmatpush1.msra.mxu0 %v37
  %54 = vmatprep.subr.mxu0 0.0
  %55 = vmatpush1.msra.mxu0 %v38
  %56 = vmatprep.subr.mxu0 0.0
  %57 = vmatpush1.msra.mxu0 %v39
  %58 = vmatprep.subr.mxu0 0.0
  %59 = vmatpush1.msra.mxu0 %v40
  %60 = vmatprep.subr.mxu0 0.0
  %61 = vmatpush1.msra.mxu0 0.0
  %62 = vmatprep.subr.mxu0 0.0
  %63 = vmatpush1.msra.mxu0 0.0
  %64 = vmatprep.subr.mxu0 0.0
  %65 = vmatpush1.msra.mxu0 0.0
  %66 = vmatprep.subr.mxu0 0.0
  %67 = vmatpush1.msra.mxu0 0.0
  %68 = vmatprep.subr.mxu0 0.0
  %69 = vmatpush1.msra.mxu0 0.0
  %70 = vmatprep.subr.mxu0 0.0
  %71 = vmatpush1.msra.mxu0 0.0
  %72 = vmatprep.subr.mxu0 0.0
  %73 = vmatpush1.msra.mxu0 0.0
  %74 = vmatprep.subr.mxu0 0.0
  %75 = vmatpush1.msra.mxu0 0.0
  %76 = vmatprep.subr.mxu0 0.0
  %77 = vmatpush1.msra.mxu0 0.0
  %78 = vmatprep.subr.mxu0 0.0
  %79 = vmatpush1.msra.mxu0 0.0
  %80 = vmatprep.subr.mxu0 0.0
  %81 = vmatpush1.msra.mxu0 0.0
  %82 = vmatprep.subr.mxu0 0.0
  %83 = vmatpush1.msra.mxu0 0.0
  %84 = vmatprep.subr.mxu0 0.0
  %85 = vmatpush1.msra.mxu0 0.0
  %86 = vmatprep.subr.mxu0 0.0
  %87 = vmatpush1.msra.mxu0 0.0
  %88 = vmatprep.subr.mxu0 0.0
  %89 = vmatpush1.msra.mxu0 0.0
  %90 = vmatprep.subr.mxu0 0.0
  %91 = vmatpush1.msra.mxu0 0.0
  %92 = vmatprep.subr.mxu0 0.0
  %93 = vmatpush1.msra.mxu0 0.0
  %94 = vmatprep.subr.mxu0 0.0
  %95 = vmatpush1.msra.mxu0 0.0
  %96 = vmatprep.subr.mxu0 0.0
  %97 = vmatpush1.msra.mxu0 0.0
  %98 = vmatprep.subr.mxu0 0.0
  %99 = vmatpush1.msra.mxu0 0.0
  %100 = vmatprep.subr.mxu0 0.0
  %101 = vmatpush1.msra.mxu0 0.0
  %102 = vmatprep.subr.mxu0 0.0
  %103 = vmatpush1.msra.mxu0 0.0
  %104 = vmatprep.subr.mxu0 0.0
  %105 = vmatpush1.msra.mxu0 0.0
  %106 = vmatprep.subr.mxu0 0.0
  %107 = vmatpush1.msra.mxu0 0.0
  %108 = vmatprep.subr.mxu0 0.0
  %109 = vmatpush1.msra.mxu0 0.0
  %110 = vmatprep.subr.mxu0 0.0
  %111 = vmatpush1.msra.mxu0 0.0
  %112 = vmatprep.subr.mxu0 0.0
  %113 = vmatpush1.msra.mxu0 0.0
  %114 = vmatprep.subr.mxu0 0.0
  %115 = vmatpush1.msra.mxu0 0.0
  %116 = vmatprep.mubr.f32.mxu0 0.0
  %117 = vmatmul.mubr.f32.gmra.mrb[0].mxu0 %v50
  %v118 = vpop.f32.mrb[0].mxu0
  %v119 = vadd.f32 %v46, %v118
  %v120 = vpop.f32.mrb[0].mxu0
  %121 = vdwg.mxu0
  %v122 = vld [vmem:[%s0] sm:$0xf]
  %v123 = vld [vmem:[%s0 + $0x4] sm:$0xf]
  %v124 = vld [vmem:[%s0 + $0x8] sm:$0xf]
  %v125 = vld [vmem:[%s0 + $0xc] sm:$0xf]
  %v126 = vld [vmem:[%s0 + $0x10] sm:$0xf]
  %v127 = vld [vmem:[%s0 + $0x14] sm:$0xf]
  %v128 = vld [vmem:[%s0 + $0x18] sm:$0xf]
  %v129 = vld [vmem:[%s0 + $0x1c] sm:$0xf]
  %v130 = vld [vmem:[%s2] sm:$0xff]
  %v131 = vld [vmem:[%s2 + $0x18] sm:$0xff]
  %v132 = vld [vmem:[%s2 + $0x30] sm:$0xff]
  %v133 = vld [vmem:[%s2 + $0x48] sm:$0xff]
  %v134 = vld [vmem:[%s2 + $0x60] sm:$0xff]
  %v135 = vld [vmem:[%s2 + $0x78] sm:$0xff]
  %v136 = vld [vmem:[%s2 + $0x90] sm:$0xff]
  %v137 = vld [vmem:[%s2 + $0xa8] sm:$0xff]
  %v138 = vld [vmem:[%s2 + $0xc0] sm:$0xff]
  %v139 = vld [vmem:[%s2 + $0xd8] sm:$0xff]
  %v140 = vld [vmem:[%s2 + $0xf0] sm:$0xff]
  %v141 = vld [vmem:[%s2 + $0x108] sm:$0xff]
  %v142 = vld [vmem:[%s2 + $0x120] sm:$0xff]
  %v143 = vld [vmem:[%s2 + $0x138] sm:$0xff]
  %v144 = vld [vmem:[%s2 + $0x150] sm:$0xff]
  %v145 = vld [vmem:[%s2 + $0x168] sm:$0xff]
  %v154 = vunpack.c.l.b16 %v122
  %v155 = vunpack.c.l.b16 %v123
  %v156 = vunpack.c.l.b16 %v124
  %v157 = vunpack.c.l.b16 %v125
  %v158 = vunpack.c.l.b16 %v126
  %v159 = vunpack.c.l.b16 %v127
  %v160 = vunpack.c.l.b16 %v128
  %v161 = vunpack.c.l.b16 %v129
  %v162 = vpack.c.b16 %v155, %v154
  %v163 = vpack.c.b16 %v157, %v156
  %v164 = vpack.c.b16 %v159, %v158
  %v165 = vpack.c.b16 %v161, %v160
  %v186 = vunpack.c.l.b16 %v130
  %v187 = vunpack.c.h.b16 %v130
  %v188 = vunpack.c.l.b16 %v131
  %v189 = vunpack.c.h.b16 %v131
  %v190 = vunpack.c.l.b16 %v132
  %v191 = vunpack.c.h.b16 %v132
  %v192 = vunpack.c.l.b16 %v133
  %v193 = vunpack.c.h.b16 %v133
  %v194 = vunpack.c.l.b16 %v134
  %v195 = vunpack.c.h.b16 %v134
  %v196 = vunpack.c.l.b16 %v135
  %v197 = vunpack.c.h.b16 %v135
  %v198 = vunpack.c.l.b16 %v136
  %v199 = vunpack.c.h.b16 %v136
  %v200 = vunpack.c.l.b16 %v137
  %v201 = vunpack.c.h.b16 %v137
  %v202 = vunpack.c.l.b16 %v138
  %v203 = vunpack.c.h.b16 %v138
  %v204 = vunpack.c.l.b16 %v139
  %v205 = vunpack.c.h.b16 %v139
  %v206 = vunpack.c.l.b16 %v140
  %v207 = vunpack.c.h.b16 %v140
  %v208 = vunpack.c.l.b16 %v141
  %v209 = vunpack.c.h.b16 %v141
  %v210 = vunpack.c.l.b16 %v142
  %v211 = vunpack.c.h.b16 %v142
  %v212 = vunpack.c.l.b16 %v143
  %v213 = vunpack.c.h.b16 %v143
  %v214 = vunpack.c.l.b16 %v144
  %v215 = vunpack.c.h.b16 %v144
  %v216 = vunpack.c.l.b16 %v145
  %v217 = vunpack.c.h.b16 %v145
  %v218 = vpack.c.b16 %v188, %v186
  %v219 = vpack.c.b16 %v189, %v187
  %v220 = vpack.c.b16 %v192, %v190
  %v221 = vpack.c.b16 %v193, %v191
  %v222 = vpack.c.b16 %v196, %v194
  %v223 = vpack.c.b16 %v197, %v195
  %v224 = vpack.c.b16 %v200, %v198
  %v225 = vpack.c.b16 %v201, %v199
  %v226 = vpack.c.b16 %v204, %v202
  %v227 = vpack.c.b16 %v205, %v203
  %v228 = vpack.c.b16 %v208, %v206
  %v229 = vpack.c.b16 %v209, %v207
  %v230 = vpack.c.b16 %v212, %v210
  %v231 = vpack.c.b16 %v213, %v211
  %v232 = vpack.c.b16 %v216, %v214
  %v233 = vpack.c.b16 %v217, %v215
  %250 = vmatprep.subr.bf16.mxu0 %v219
  %251 = vmatpush1.bf16.msra.mxu0 %v218
  %252 = vmatprep.subr.bf16.mxu0 %v221
  %253 = vmatpush1.bf16.msra.mxu0 %v220
  %254 = vmatprep.subr.bf16.mxu0 %v223
  %255 = vmatpush1.bf16.msra.mxu0 %v222
  %256 = vmatprep.subr.bf16.mxu0 %v225
  %257 = vmatpush1.bf16.msra.mxu0 %v224
  %258 = vmatprep.subr.bf16.mxu0 %v227
  %259 = vmatpush1.bf16.msra.mxu0 %v226
  %260 = vmatprep.subr.bf16.mxu0 %v229
  %261 = vmatpush1.bf16.msra.mxu0 %v228
  %262 = vmatprep.subr.bf16.mxu0 %v231
  %263 = vmatpush1.bf16.msra.mxu0 %v230
  %264 = vmatprep.subr.bf16.mxu0 %v233
  %265 = vmatpush1.bf16.msra.mxu0 %v232
  %266 = vmatprep.subr.bf16.mxu0 0
  %267 = vmatpush1.bf16.msra.mxu0 0
  %268 = vmatprep.subr.bf16.mxu0 0
  %269 = vmatpush1.bf16.msra.mxu0 0
  %270 = vmatprep.subr.bf16.mxu0 0
  %271 = vmatpush1.bf16.msra.mxu0 0
  %272 = vmatprep.subr.bf16.mxu0 0
  %273 = vmatpush1.bf16.msra.mxu0 0
  %274 = vmatprep.subr.bf16.mxu0 0
  %275 = vmatpush1.bf16.msra.mxu0 0
  %276 = vmatprep.subr.bf16.mxu0 0
  %277 = vmatpush1.bf16.msra.mxu0 0
  %278 = vmatprep.subr.bf16.mxu0 0
  %279 = vmatpush1.bf16.msra.mxu0 0
  %280 = vmatprep.subr.bf16.mxu0 0
  %281 = vmatpush1.bf16.msra.mxu0 0
  %282 = vmatprep.mubr.bf16.mxu0 0
  %283 = vmatmul.mubr.bf16.gmra.mrb[0].mxu0 %v162
  %v284 = vpop.f32.mrb[0].mxu0
  %v285 = vadd.f32 0.0, %v284
  %v286 = vpop.f32.mrb[0].mxu0
  %v287 = vadd.f32 0.0, %v286
  %v288 = vpop.f32.mrb[0].mxu0
  %v289 = vadd.f32 0.0, %v288
  %v290 = vpop.f32.mrb[0].mxu0
  %v291 = vadd.f32 0.0, %v290
  %292 = vmatprep.mubr.bf16.mxu0 0
  %293 = vmatmul.mubr.bf16.gmra.mrb[0].mxu0 %v163
  %v294 = vpop.f32.mrb[0].mxu0
  %v295 = vadd.f32 0.0, %v294
  %v296 = vpop.f32.mrb[0].mxu0
  %v297 = vadd.f32 0.0, %v296
  %v298 = vpop.f32.mrb[0].mxu0
  %v299 = vadd.f32 0.0, %v298
  %v300 = vpop.f32.mrb[0].mxu0
  %v301 = vadd.f32 0.0, %v300
  %302 = vmatprep.mubr.bf16.mxu0 0
  %303 = vmatmul.mubr.bf16.gmra.mrb[0].mxu0 %v164
  %v304 = vpop.f32.mrb[0].mxu0
  %v305 = vadd.f32 0.0, %v304
  %v306 = vpop.f32.mrb[0].mxu0
  %v307 = vadd.f32 0.0, %v306
  %v308 = vpop.f32.mrb[0].mxu0
  %v309 = vadd.f32 0.0, %v308
  %v310 = vpop.f32.mrb[0].mxu0
  %v311 = vadd.f32 0.0, %v310
  %312 = vmatprep.mubr.bf16.mxu0 0
  %313 = vmatmul.mubr.bf16.gmra.mrb[0].mxu0 %v165
  %v314 = vpop.f32.mrb[0].mxu0
  %v315 = vadd.f32 0.0, %v314
  %v316 = vpop.f32.mrb[0].mxu0
  %v317 = vadd.f32 0.0, %v316
  %v318 = vpop.f32.mrb[0].mxu0
  %v319 = vadd.f32 0.0, %v318
  %v320 = vpop.f32.mrb[0].mxu0
  %v321 = vadd.f32 0.0, %v320
  %322 = vdwg.mxu0
  %v323 = vld [vmem:[%s3] sm:$0x1]
  %v324 = vld [vmem:[%s4] sm:$0x1]
  %v325 = vlaneseq
  %v326 = vshrl.u32 %v325, 7
  %v327 = vsub.s32 0, %v326
  %v328 = vrot.slane %v324, %v327
  %v329 = vadd.f32 %v119, %v328
  %v330 = vlaneseq
  %v331 = vshrl.u32 %v330, 7
  %v332 = vsub.s32 0, %v331
  %v333 = vrot.slane %v323, %v332
  %v334 = vadd.f32 %v285, %v333
  %v335 = vadd.f32 %v289, %v333
  %v336 = vadd.f32 %v295, %v333
  %v337 = vadd.f32 %v299, %v333
  %v338 = vadd.f32 %v305, %v333
  %v339 = vadd.f32 %v309, %v333
  %v340 = vadd.f32 %v315, %v333
  %v341 = vadd.f32 %v319, %v333
  %v342 = vtanh.pop %v334
  %v343 = vtanh.pop %v335
  %v344 = vtanh.pop %v336
  %v345 = vtanh.pop %v337
  %v346 = vtanh.pop %v338
  %v347 = vtanh.pop %v339
  %v348 = vtanh.pop %v340
  %v349 = vtanh.pop %v341
  %v352 = vunpack.c.l.s4 1966171168
  %v353 = vunpack.c.0.s8 %v352
  %v354 = vlaneseq
  %v355 = vshrl.u32 %v354, 7
  %v356 = vsub.s32 %v353, %v355
  %v357 = vrot.slane %v329, %v356
  %v358 = vcombine.high %v357, %v357
  %v360 = vunpack.c.l.s4 1966171168
  %v361 = vunpack.c.0.s8 %v360
  %v362 = vlaneseq
  %v363 = vshrl.u32 %v362, 7
  %v364 = vsub.s32 %v361, %v363
  %v365 = vrot.slane %v357, %v364
  %v367 = vunpack.c.l.s4 1966171168
  %v368 = vunpack.c.0.s8 %v367
  %v369 = vlaneseq
  %v370 = vshrl.u32 %v369, 7
  %v371 = vsub.s32 %v368, %v370
  %v372 = vrot.slane %v358, %v371
  %v373 = vcombine.high %v365, %v365
  %v374 = vcombine.high %v372, %v372
  %v375 = vlaneseq
  %v376 = vshrl.u32 %v375, 7
  %v377 = vsub.s32 0, %v376
  %v378 = vrot.slane %v365, %v377
  %v379 = vlaneseq
  %v380 = vshrl.u32 %v379, 7
  %v381 = vsub.s32 0, %v380
  %v382 = vrot.slane %v372, %v381
  %v383 = vlaneseq
  %v384 = vshrl.u32 %v383, 7
  %v385 = vsub.s32 0, %v384
  %v386 = vrot.slane %v373, %v385
  %v387 = vlaneseq
  %v388 = vshrl.u32 %v387, 7
  %v389 = vsub.s32 0, %v388
  %v390 = vrot.slane %v374, %v389
  %v395 = vadd.f32 %v287, %v378
  %v396 = vadd.f32 %v291, %v378
  %v397 = vadd.f32 %v297, %v382
  %v398 = vadd.f32 %v301, %v382
  %v399 = vadd.f32 %v307, %v386
  %v400 = vadd.f32 %v311, %v386
  %v401 = vadd.f32 %v317, %v390
  %v402 = vadd.f32 %v321, %v390
  %v403 = vmax.f32 %v395, 0.0
  %v404 = vmax.f32 %v396, 0.0
  %v405 = vmax.f32 %v397, 0.0
  %v406 = vmax.f32 %v398, 0.0
  %v407 = vmax.f32 %v399, 0.0
  %v408 = vmax.f32 %v400, 0.0
  %v409 = vmax.f32 %v401, 0.0
  %v410 = vmax.f32 %v402, 0.0
  %v411 = vmul.f32 %v342, %v403
  %v412 = vmul.f32 %v343, %v404
  %v413 = vmul.f32 %v344, %v405
  %v414 = vmul.f32 %v345, %v406
  %v415 = vmul.f32 %v346, %v407
  %v416 = vmul.f32 %v347, %v408
  %v417 = vmul.f32 %v348, %v409
  %v418 = vmul.f32 %v349, %v410
  %v419 = vld [vmem:[%s5] sm:$0xff]
  %v420 = vld [vmem:[%s5 + $0x8] sm:$0xff]
  %422 = vset.pattern.permute.xlu0 0
  %423 = vperm.xlu0 %422, %v419
  %v424 = vpop.permute.xlu0 %423
  %427 = vset.pattern.permute.xlu0 0
  %428 = vperm.xlu0 %427, %v420
  %v429 = vpop.permute.xlu0 %428
  %v431 = vadd.f32 %v411, %v424
  %v432 = vadd.f32 %v412, %v429
  %v433 = vadd.f32 %v413, %v424
  %v434 = vadd.f32 %v414, %v429
  %v435 = vadd.f32 %v415, %v424
  %v436 = vadd.f32 %v416, %v429
  %v437 = vadd.f32 %v417, %v424
  %v438 = vadd.f32 %v418, %v429
  %v439 = vmax.f32 %v431, %v432
  %v440 = vrot.slane %v439, 4
  %v441 = vmax.f32 %v439, %v440
  %v442 = vrot.slane %v441, 2
  %v443 = vmax.f32 %v441, %v442
  %v444 = vrot.slane %v443, 1
  %v445 = vmax.f32 %v443, %v444
  %v446 = vmax.f32 %v433, %v434
  %v447 = vrot.slane %v446, 4
  %v448 = vmax.f32 %v446, %v447
  %v449 = vrot.slane %v448, 2
  %v450 = vmax.f32 %v448, %v449
  %v451 = vrot.slane %v450, 1
  %v452 = vmax.f32 %v450, %v451
  %v453 = vmax.f32 %v435, %v436
  %v454 = vrot.slane %v453, 4
  %v455 = vmax.f32 %v453, %v454
  %v456 = vrot.slane %v455, 2
  %v457 = vmax.f32 %v455, %v456
  %v458 = vrot.slane %v457, 1
  %v459 = vmax.f32 %v457, %v458
  %v460 = vmax.f32 %v437, %v438
  %v461 = vrot.slane %v460, 4
  %v462 = vmax.f32 %v460, %v461
  %v463 = vrot.slane %v462, 2
  %v464 = vmax.f32 %v462, %v463
  %v465 = vrot.slane %v464, 1
  %v466 = vmax.f32 %v464, %v465
  %v467 = vld [vmem:[%s2 + $0x8] sm:$0xff]
  %v468 = vld [vmem:[%s2 + $0x20] sm:$0xff]
  %v469 = vld [vmem:[%s2 + $0x38] sm:$0xff]
  %v470 = vld [vmem:[%s2 + $0x50] sm:$0xff]
  %v471 = vld [vmem:[%s2 + $0x68] sm:$0xff]
  %v472 = vld [vmem:[%s2 + $0x80] sm:$0xff]
  %v473 = vld [vmem:[%s2 + $0x98] sm:$0xff]
  %v474 = vld [vmem:[%s2 + $0xb0] sm:$0xff]
  %v475 = vld [vmem:[%s2 + $0xc8] sm:$0xff]
  %v476 = vld [vmem:[%s2 + $0xe0] sm:$0xff]
  %v477 = vld [vmem:[%s2 + $0xf8] sm:$0xff]
  %v478 = vld [vmem:[%s2 + $0x110] sm:$0xff]
  %v479 = vld [vmem:[%s2 + $0x128] sm:$0xff]
  %v480 = vld [vmem:[%s2 + $0x140] sm:$0xff]
  %v481 = vld [vmem:[%s2 + $0x158] sm:$0xff]
  %v482 = vld [vmem:[%s2 + $0x170] sm:$0xff]
  %v499 = vunpack.c.l.b16 %v467
  %v500 = vunpack.c.h.b16 %v467
  %v501 = vunpack.c.l.b16 %v468
  %v502 = vunpack.c.h.b16 %v468
  %v503 = vunpack.c.l.b16 %v469
  %v504 = vunpack.c.h.b16 %v469
  %v505 = vunpack.c.l.b16 %v470
  %v506 = vunpack.c.h.b16 %v470
  %v507 = vunpack.c.l.b16 %v471
  %v508 = vunpack.c.h.b16 %v471
  %v509 = vunpack.c.l.b16 %v472
  %v510 = vunpack.c.h.b16 %v472
  %v511 = vunpack.c.l.b16 %v473
  %v512 = vunpack.c.h.b16 %v473
  %v513 = vunpack.c.l.b16 %v474
  %v514 = vunpack.c.h.b16 %v474
  %v515 = vunpack.c.l.b16 %v475
  %v516 = vunpack.c.h.b16 %v475
  %v517 = vunpack.c.l.b16 %v476
  %v518 = vunpack.c.h.b16 %v476
  %v519 = vunpack.c.l.b16 %v477
  %v520 = vunpack.c.h.b16 %v477
  %v521 = vunpack.c.l.b16 %v478
  %v522 = vunpack.c.h.b16 %v478
  %v523 = vunpack.c.l.b16 %v479
  %v524 = vunpack.c.h.b16 %v479
  %v525 = vunpack.c.l.b16 %v480
  %v526 = vunpack.c.h.b16 %v480
  %v527 = vunpack.c.l.b16 %v481
  %v528 = vunpack.c.h.b16 %v481
  %v529 = vunpack.c.l.b16 %v482
  %v530 = vunpack.c.h.b16 %v482
  %v531 = vpack.c.b16 %v501, %v499
  %v532 = vpack.c.b16 %v502, %v500
  %v533 = vpack.c.b16 %v505, %v503
  %v534 = vpack.c.b16 %v506, %v504
  %v535 = vpack.c.b16 %v509, %v507
  %v536 = vpack.c.b16 %v510, %v508
  %v537 = vpack.c.b16 %v513, %v511
  %v538 = vpack.c.b16 %v514, %v512
  %v539 = vpack.c.b16 %v517, %v515
  %v540 = vpack.c.b16 %v518, %v516
  %v541 = vpack.c.b16 %v521, %v519
  %v542 = vpack.c.b16 %v522, %v520
  %v543 = vpack.c.b16 %v525, %v523
  %v544 = vpack.c.b16 %v526, %v524
  %v545 = vpack.c.b16 %v529, %v527
  %v546 = vpack.c.b16 %v530, %v528
  %563 = vmatprep.subr.bf16.mxu0 %v532
  %564 = vmatpush1.bf16.msra.mxu0 %v531
  %565 = vmatprep.subr.bf16.mxu0 %v534
  %566 = vmatpush1.bf16.msra.mxu0 %v533
  %567 = vmatprep.subr.bf16.mxu0 %v536
  %568 = vmatpush1.bf16.msra.mxu0 %v535
  %569 = vmatprep.subr.bf16.mxu0 %v538
  %570 = vmatpush1.bf16.msra.mxu0 %v537
  %571 = vmatprep.subr.bf16.mxu0 %v540
  %572 = vmatpush1.bf16.msra.mxu0 %v539
  %573 = vmatprep.subr.bf16.mxu0 %v542
  %574 = vmatpush1.bf16.msra.mxu0 %v541
  %575 = vmatprep.subr.bf16.mxu0 %v544
  %576 = vmatpush1.bf16.msra.mxu0 %v543
  %577 = vmatprep.subr.bf16.mxu0 %v546
  %578 = vmatpush1.bf16.msra.mxu0 %v545
  %579 = vmatprep.subr.bf16.mxu0 0
  %580 = vmatpush1.bf16.msra.mxu0 0
  %581 = vmatprep.subr.bf16.mxu0 0
  %582 = vmatpush1.bf16.msra.mxu0 0
  %583 = vmatprep.subr.bf16.mxu0 0
  %584 = vmatpush1.bf16.msra.mxu0 0
  %585 = vmatprep.subr.bf16.mxu0 0
  %586 = vmatpush1.bf16.msra.mxu0 0
  %587 = vmatprep.subr.bf16.mxu0 0
  %588 = vmatpush1.bf16.msra.mxu0 0
  %589 = vmatprep.subr.bf16.mxu0 0
  %590 = vmatpush1.bf16.msra.mxu0 0
  %591 = vmatprep.subr.bf16.mxu0 0
  %592 = vmatpush1.bf16.msra.mxu0 0
  %593 = vmatprep.subr.bf16.mxu0 0
  %594 = vmatpush1.bf16.msra.mxu0 0
  %595 = vmatprep.mubr.bf16.mxu0 0
  %596 = vmatmul.mubr.bf16.gmra.mrb[0].mxu0 %v162
  %v597 = vpop.f32.mrb[0].mxu0
  %v598 = vadd.f32 0.0, %v597
  %v599 = vpop.f32.mrb[0].mxu0
  %v600 = vadd.f32 0.0, %v599
  %v601 = vpop.f32.mrb[0].mxu0
  %v602 = vadd.f32 0.0, %v601
  %v603 = vpop.f32.mrb[0].mxu0
  %v604 = vadd.f32 0.0, %v603
  %605 = vmatprep.mubr.bf16.mxu0 0
  %606 = vmatmul.mubr.bf16.gmra.mrb[0].mxu0 %v163
  %v607 = vpop.f32.mrb[0].mxu0
  %v608 = vadd.f32 0.0, %v607
  %v609 = vpop.f32.mrb[0].mxu0
  %v610 = vadd.f32 0.0, %v609
  %v611 = vpop.f32.mrb[0].mxu0
  %v612 = vadd.f32 0.0, %v611
  %v613 = vpop.f32.mrb[0].mxu0
  %v614 = vadd.f32 0.0, %v613
  %615 = vmatprep.mubr.bf16.mxu0 0
  %616 = vmatmul.mubr.bf16.gmra.mrb[0].mxu0 %v164
  %v617 = vpop.f32.mrb[0].mxu0
  %v618 = vadd.f32 0.0, %v617
  %v619 = vpop.f32.mrb[0].mxu0
  %v620 = vadd.f32 0.0, %v619
  %v621 = vpop.f32.mrb[0].mxu0
  %v622 = vadd.f32 0.0, %v621
  %v623 = vpop.f32.mrb[0].mxu0
  %v624 = vadd.f32 0.0, %v623
  %625 = vmatprep.mubr.bf16.mxu0 0
  %626 = vmatmul.mubr.bf16.gmra.mrb[0].mxu0 %v165
  %v627 = vpop.f32.mrb[0].mxu0
  %v628 = vadd.f32 0.0, %v627
  %v629 = vpop.f32.mrb[0].mxu0
  %v630 = vadd.f32 0.0, %v629
  %v631 = vpop.f32.mrb[0].mxu0
  %v632 = vadd.f32 0.0, %v631
  %v633 = vpop.f32.mrb[0].mxu0
  %v634 = vadd.f32 0.0, %v633
  %635 = vdwg.mxu0
  %v636 = vld [vmem:[%s3 + $0x1] sm:$0x1]
  %v637 = vld [vmem:[%s4 + $0x1] sm:$0x1]
  %v638 = vlaneseq
  %v639 = vshrl.u32 %v638, 7
  %v640 = vsub.s32 0, %v639
  %v641 = vrot.slane %v637, %v640
  %v642 = vadd.f32 %v119, %v641
  %v643 = vlaneseq
  %v644 = vshrl.u32 %v643, 7
  %v645 = vsub.s32 0, %v644
  %v646 = vrot.slane %v636, %v645
  %v647 = vadd.f32 %v598, %v646
  %v648 = vadd.f32 %v602, %v646
  %v649 = vadd.f32 %v608, %v646
  %v650 = vadd.f32 %v612, %v646
  %v651 = vadd.f32 %v618, %v646
  %v652 = vadd.f32 %v622, %v646
  %v653 = vadd.f32 %v628, %v646
  %v654 = vadd.f32 %v632, %v646
  %v655 = vtanh.pop %v647
  %v656 = vtanh.pop %v648
  %v657 = vtanh.pop %v649
  %v658 = vtanh.pop %v650
  %v659 = vtanh.pop %v651
  %v660 = vtanh.pop %v652
  %v661 = vtanh.pop %v653
  %v662 = vtanh.pop %v654
  %v665 = vunpack.c.l.s4 1966171168
  %v666 = vunpack.c.0.s8 %v665
  %v667 = vlaneseq
  %v668 = vshrl.u32 %v667, 7
  %v669 = vsub.s32 %v666, %v668
  %v670 = vrot.slane %v642, %v669
  %v671 = vcombine.high %v670, %v670
  %v673 = vunpack.c.l.s4 1966171168
  %v674 = vunpack.c.0.s8 %v673
  %v675 = vlaneseq
  %v676 = vshrl.u32 %v675, 7
  %v677 = vsub.s32 %v674, %v676
  %v678 = vrot.slane %v670, %v677
  %v680 = vunpack.c.l.s4 1966171168
  %v681 = vunpack.c.0.s8 %v680
  %v682 = vlaneseq
  %v683 = vshrl.u32 %v682, 7
  %v684 = vsub.s32 %v681, %v683
  %v685 = vrot.slane %v671, %v684
  %v686 = vcombine.high %v678, %v678
  %v687 = vcombine.high %v685, %v685
  %v688 = vlaneseq
  %v689 = vshrl.u32 %v688, 7
  %v690 = vsub.s32 0, %v689
  %v691 = vrot.slane %v678, %v690
  %v692 = vlaneseq
  %v693 = vshrl.u32 %v692, 7
  %v694 = vsub.s32 0, %v693
  %v695 = vrot.slane %v685, %v694
  %v696 = vlaneseq
  %v697 = vshrl.u32 %v696, 7
  %v698 = vsub.s32 0, %v697
  %v699 = vrot.slane %v686, %v698
  %v700 = vlaneseq
  %v701 = vshrl.u32 %v700, 7
  %v702 = vsub.s32 0, %v701
  %v703 = vrot.slane %v687, %v702
  %v708 = vadd.f32 %v600, %v691
  %v709 = vadd.f32 %v604, %v691
  %v710 = vadd.f32 %v610, %v695
  %v711 = vadd.f32 %v614, %v695
  %v712 = vadd.f32 %v620, %v699
  %v713 = vadd.f32 %v624, %v699
  %v714 = vadd.f32 %v630, %v703
  %v715 = vadd.f32 %v634, %v703
  %v716 = vmax.f32 %v708, 0.0
  %v717 = vmax.f32 %v709, 0.0
  %v718 = vmax.f32 %v710, 0.0
  %v719 = vmax.f32 %v711, 0.0
  %v720 = vmax.f32 %v712, 0.0
  %v721 = vmax.f32 %v713, 0.0
  %v722 = vmax.f32 %v714, 0.0
  %v723 = vmax.f32 %v715, 0.0
  %v724 = vmul.f32 %v655, %v716
  %v725 = vmul.f32 %v656, %v717
  %v726 = vmul.f32 %v657, %v718
  %v727 = vmul.f32 %v658, %v719
  %v728 = vmul.f32 %v659, %v720
  %v729 = vmul.f32 %v660, %v721
  %v730 = vmul.f32 %v661, %v722
  %v731 = vmul.f32 %v662, %v723
  %s732 = scalar_lea.vmem %s5, 16
  %v733 = vld [vmem:[%s732] sm:$0xff]
  %v734 = vld [vmem:[%s732 + $0x8] sm:$0xff]
  %736 = vset.pattern.permute.xlu0 0
  %737 = vperm.xlu0 %736, %v733
  %v738 = vpop.permute.xlu0 %737
  %741 = vset.pattern.permute.xlu0 0
  %742 = vperm.xlu0 %741, %v734
  %v743 = vpop.permute.xlu0 %742
  %v745 = vadd.f32 %v724, %v738
  %v746 = vadd.f32 %v725, %v743
  %v747 = vadd.f32 %v726, %v738
  %v748 = vadd.f32 %v727, %v743
  %v749 = vadd.f32 %v728, %v738
  %v750 = vadd.f32 %v729, %v743
  %v751 = vadd.f32 %v730, %v738
  %v752 = vadd.f32 %v731, %v743
  %v753 = vmax.f32 %v745, %v746
  %v754 = vrot.slane %v753, 4
  %v755 = vmax.f32 %v753, %v754
  %v756 = vrot.slane %v755, 2
  %v757 = vmax.f32 %v755, %v756
  %v758 = vrot.slane %v757, 1
  %v759 = vmax.f32 %v757, %v758
  %v760 = vmax.f32 %v747, %v748
  %v761 = vrot.slane %v760, 4
  %v762 = vmax.f32 %v760, %v761
  %v763 = vrot.slane %v762, 2
  %v764 = vmax.f32 %v762, %v763
  %v765 = vrot.slane %v764, 1
  %v766 = vmax.f32 %v764, %v765
  %v767 = vmax.f32 %v749, %v750
  %v768 = vrot.slane %v767, 4
  %v769 = vmax.f32 %v767, %v768
  %v770 = vrot.slane %v769, 2
  %v771 = vmax.f32 %v769, %v770
  %v772 = vrot.slane %v771, 1
  %v773 = vmax.f32 %v771, %v772
  %v774 = vmax.f32 %v751, %v752
  %v775 = vrot.slane %v774, 4
  %v776 = vmax.f32 %v774, %v775
  %v777 = vrot.slane %v776, 2
  %v778 = vmax.f32 %v776, %v777
  %v779 = vrot.slane %v778, 1
  %v780 = vmax.f32 %v778, %v779
  %v781 = vld [vmem:[%s2 + $0x10] sm:$0xff]
  %v782 = vld [vmem:[%s2 + $0x28] sm:$0xff]
  %v783 = vld [vmem:[%s2 + $0x40] sm:$0xff]
  %v784 = vld [vmem:[%s2 + $0x58] sm:$0xff]
  %v785 = vld [vmem:[%s2 + $0x70] sm:$0xff]
  %v786 = vld [vmem:[%s2 + $0x88] sm:$0xff]
  %v787 = vld [vmem:[%s2 + $0xa0] sm:$0xff]
  %v788 = vld [vmem:[%s2 + $0xb8] sm:$0xff]
  %v789 = vld [vmem:[%s2 + $0xd0] sm:$0xff]
  %v790 = vld [vmem:[%s2 + $0xe8] sm:$0xff]
  %v791 = vld [vmem:[%s2 + $0x100] sm:$0xff]
  %v792 = vld [vmem:[%s2 + $0x118] sm:$0xff]
  %v793 = vld [vmem:[%s2 + $0x130] sm:$0xff]
  %v794 = vld [vmem:[%s2 + $0x148] sm:$0xff]
  %v795 = vld [vmem:[%s2 + $0x160] sm:$0xff]
  %v796 = vld [vmem:[%s2 + $0x178] sm:$0xff]
  %v813 = vunpack.c.l.b16 %v781
  %v814 = vunpack.c.h.b16 %v781
  %v815 = vunpack.c.l.b16 %v782
  %v816 = vunpack.c.h.b16 %v782
  %v817 = vunpack.c.l.b16 %v783
  %v818 = vunpack.c.h.b16 %v783
  %v819 = vunpack.c.l.b16 %v784
  %v820 = vunpack.c.h.b16 %v784
  %v821 = vunpack.c.l.b16 %v785
  %v822 = vunpack.c.h.b16 %v785
  %v823 = vunpack.c.l.b16 %v786
  %v824 = vunpack.c.h.b16 %v786
  %v825 = vunpack.c.l.b16 %v787
  %v826 = vunpack.c.h.b16 %v787
  %v827 = vunpack.c.l.b16 %v788
  %v828 = vunpack.c.h.b16 %v788
  %v829 = vunpack.c.l.b16 %v789
  %v830 = vunpack.c.h.b16 %v789
  %v831 = vunpack.c.l.b16 %v790
  %v832 = vunpack.c.h.b16 %v790
  %v833 = vunpack.c.l.b16 %v791
  %v834 = vunpack.c.h.b16 %v791
  %v835 = vunpack.c.l.b16 %v792
  %v836 = vunpack.c.h.b16 %v792
  %v837 = vunpack.c.l.b16 %v793
  %v838 = vunpack.c.h.b16 %v793
  %v839 = vunpack.c.l.b16 %v794
  %v840 = vunpack.c.h.b16 %v794
  %v841 = vunpack.c.l.b16 %v795
  %v842 = vunpack.c.h.b16 %v795
  %v843 = vunpack.c.l.b16 %v796
  %v844 = vunpack.c.h.b16 %v796
  %v845 = vpack.c.b16 %v815, %v813
  %v846 = vpack.c.b16 %v816, %v814
  %v847 = vpack.c.b16 %v819, %v817
  %v848 = vpack.c.b16 %v820, %v818
  %v849 = vpack.c.b16 %v823, %v821
  %v850 = vpack.c.b16 %v824, %v822
  %v851 = vpack.c.b16 %v827, %v825
  %v852 = vpack.c.b16 %v828, %v826
  %v853 = vpack.c.b16 %v831, %v829
  %v854 = vpack.c.b16 %v832, %v830
  %v855 = vpack.c.b16 %v835, %v833
  %v856 = vpack.c.b16 %v836, %v834
  %v857 = vpack.c.b16 %v839, %v837
  %v858 = vpack.c.b16 %v840, %v838
  %v859 = vpack.c.b16 %v843, %v841
  %v860 = vpack.c.b16 %v844, %v842
  %877 = vmatprep.subr.bf16.mxu0 %v846
  %878 = vmatpush1.bf16.msra.mxu0 %v845
  %879 = vmatprep.subr.bf16.mxu0 %v848
  %880 = vmatpush1.bf16.msra.mxu0 %v847
  %881 = vmatprep.subr.bf16.mxu0 %v850
  %882 = vmatpush1.bf16.msra.mxu0 %v849
  %883 = vmatprep.subr.bf16.mxu0 %v852
  %884 = vmatpush1.bf16.msra.mxu0 %v851
  %885 = vmatprep.subr.bf16.mxu0 %v854
  %886 = vmatpush1.bf16.msra.mxu0 %v853
  %887 = vmatprep.subr.bf16.mxu0 %v856
  %888 = vmatpush1.bf16.msra.mxu0 %v855
  %889 = vmatprep.subr.bf16.mxu0 %v858
  %890 = vmatpush1.bf16.msra.mxu0 %v857
  %891 = vmatprep.subr.bf16.mxu0 %v860
  %892 = vmatpush1.bf16.msra.mxu0 %v859
  %893 = vmatprep.subr.bf16.mxu0 0
  %894 = vmatpush1.bf16.msra.mxu0 0
  %895 = vmatprep.subr.bf16.mxu0 0
  %896 = vmatpush1.bf16.msra.mxu0 0
  %897 = vmatprep.subr.bf16.mxu0 0
  %898 = vmatpush1.bf16.msra.mxu0 0
  %899 = vmatprep.subr.bf16.mxu0 0
  %900 = vmatpush1.bf16.msra.mxu0 0
  %901 = vmatprep.subr.bf16.mxu0 0
  %902 = vmatpush1.bf16.msra.mxu0 0
  %903 = vmatprep.subr.bf16.mxu0 0
  %904 = vmatpush1.bf16.msra.mxu0 0
  %905 = vmatprep.subr.bf16.mxu0 0
  %906 = vmatpush1.bf16.msra.mxu0 0
  %907 = vmatprep.subr.bf16.mxu0 0
  %908 = vmatpush1.bf16.msra.mxu0 0
  %909 = vmatprep.mubr.bf16.mxu0 0
  %910 = vmatmul.mubr.bf16.gmra.mrb[0].mxu0 %v162
  %v911 = vpop.f32.mrb[0].mxu0
  %v912 = vadd.f32 0.0, %v911
  %v913 = vpop.f32.mrb[0].mxu0
  %v914 = vadd.f32 0.0, %v913
  %v915 = vpop.f32.mrb[0].mxu0
  %v916 = vadd.f32 0.0, %v915
  %v917 = vpop.f32.mrb[0].mxu0
  %v918 = vadd.f32 0.0, %v917
  %919 = vmatprep.mubr.bf16.mxu0 0
  %920 = vmatmul.mubr.bf16.gmra.mrb[0].mxu0 %v163
  %v921 = vpop.f32.mrb[0].mxu0
  %v922 = vadd.f32 0.0, %v921
  %v923 = vpop.f32.mrb[0].mxu0
  %v924 = vadd.f32 0.0, %v923
  %v925 = vpop.f32.mrb[0].mxu0
  %v926 = vadd.f32 0.0, %v925
  %v927 = vpop.f32.mrb[0].mxu0
  %v928 = vadd.f32 0.0, %v927
  %929 = vmatprep.mubr.bf16.mxu0 0
  %930 = vmatmul.mubr.bf16.gmra.mrb[0].mxu0 %v164
  %v931 = vpop.f32.mrb[0].mxu0
  %v932 = vadd.f32 0.0, %v931
  %v933 = vpop.f32.mrb[0].mxu0
  %v934 = vadd.f32 0.0, %v933
  %v935 = vpop.f32.mrb[0].mxu0
  %v936 = vadd.f32 0.0, %v935
  %v937 = vpop.f32.mrb[0].mxu0
  %v938 = vadd.f32 0.0, %v937
  %939 = vmatprep.mubr.bf16.mxu0 0
  %940 = vmatmul.mubr.bf16.gmra.mrb[0].mxu0 %v165
  %v941 = vpop.f32.mrb[0].mxu0
  %v942 = vadd.f32 0.0, %v941
  %v943 = vpop.f32.mrb[0].mxu0
  %v944 = vadd.f32 0.0, %v943
  %v945 = vpop.f32.mrb[0].mxu0
  %v946 = vadd.f32 0.0, %v945
  %v947 = vpop.f32.mrb[0].mxu0
  %v948 = vadd.f32 0.0, %v947
  %949 = vdwg.mxu0
  %v950 = vld [vmem:[%s3 + $0x2] sm:$0x1]
  %v951 = vld [vmem:[%s4 + $0x2] sm:$0x1]
  %v952 = vlaneseq
  %v953 = vshrl.u32 %v952, 7
  %v954 = vsub.s32 0, %v953
  %v955 = vrot.slane %v951, %v954
  %v956 = vadd.f32 %v119, %v955
  %v957 = vlaneseq
  %v958 = vshrl.u32 %v957, 7
  %v959 = vsub.s32 0, %v958
  %v960 = vrot.slane %v950, %v959
  %v961 = vadd.f32 %v912, %v960
  %v962 = vadd.f32 %v916, %v960
  %v963 = vadd.f32 %v922, %v960
  %v964 = vadd.f32 %v926, %v960
  %v965 = vadd.f32 %v932, %v960
  %v966 = vadd.f32 %v936, %v960
  %v967 = vadd.f32 %v942, %v960
  %v968 = vadd.f32 %v946, %v960
  %v969 = vtanh.pop %v961
  %v970 = vtanh.pop %v962
  %v971 = vtanh.pop %v963
  %v972 = vtanh.pop %v964
  %v973 = vtanh.pop %v965
  %v974 = vtanh.pop %v966
  %v975 = vtanh.pop %v967
  %v976 = vtanh.pop %v968
  %v979 = vunpack.c.l.s4 1966171168
  %v980 = vunpack.c.0.s8 %v979
  %v981 = vlaneseq
  %v982 = vshrl.u32 %v981, 7
  %v983 = vsub.s32 %v980, %v982
  %v984 = vrot.slane %v956, %v983
  %v985 = vcombine.high %v984, %v984
  %v987 = vunpack.c.l.s4 1966171168
  %v988 = vunpack.c.0.s8 %v987
  %v989 = vlaneseq
  %v990 = vshrl.u32 %v989, 7
  %v991 = vsub.s32 %v988, %v990
  %v992 = vrot.slane %v984, %v991
  %v994 = vunpack.c.l.s4 1966171168
  %v995 = vunpack.c.0.s8 %v994
  %v996 = vlaneseq
  %v997 = vshrl.u32 %v996, 7
  %v998 = vsub.s32 %v995, %v997
  %v999 = vrot.slane %v985, %v998
  %v1000 = vcombine.high %v992, %v992
  %v1001 = vcombine.high %v999, %v999
  %v1002 = vlaneseq
  %v1003 = vshrl.u32 %v1002, 7
  %v1004 = vsub.s32 0, %v1003
  %v1005 = vrot.slane %v992, %v1004
  %v1006 = vlaneseq
  %v1007 = vshrl.u32 %v1006, 7
  %v1008 = vsub.s32 0, %v1007
  %v1009 = vrot.slane %v999, %v1008
  %v1010 = vlaneseq
  %v1011 = vshrl.u32 %v1010, 7
  %v1012 = vsub.s32 0, %v1011
  %v1013 = vrot.slane %v1000, %v1012
  %v1014 = vlaneseq
  %v1015 = vshrl.u32 %v1014, 7
  %v1016 = vsub.s32 0, %v1015
  %v1017 = vrot.slane %v1001, %v1016
  %v1022 = vadd.f32 %v914, %v1005
  %v1023 = vadd.f32 %v918, %v1005
  %v1024 = vadd.f32 %v924, %v1009
  %v1025 = vadd.f32 %v928, %v1009
  %v1026 = vadd.f32 %v934, %v1013
  %v1027 = vadd.f32 %v938, %v1013
  %v1028 = vadd.f32 %v944, %v1017
  %v1029 = vadd.f32 %v948, %v1017
  %v1030 = vmax.f32 %v1022, 0.0
  %v1031 = vmax.f32 %v1023, 0.0
  %v1032 = vmax.f32 %v1024, 0.0
  %v1033 = vmax.f32 %v1025, 0.0
  %v1034 = vmax.f32 %v1026, 0.0
  %v1035 = vmax.f32 %v1027, 0.0
  %v1036 = vmax.f32 %v1028, 0.0
  %v1037 = vmax.f32 %v1029, 0.0
  %v1038 = vmul.f32 %v969, %v1030
  %v1039 = vmul.f32 %v970, %v1031
  %v1040 = vmul.f32 %v971, %v1032
  %v1041 = vmul.f32 %v972, %v1033
  %v1042 = vmul.f32 %v973, %v1034
  %v1043 = vmul.f32 %v974, %v1035
  %v1044 = vmul.f32 %v975, %v1036
  %v1045 = vmul.f32 %v976, %v1037
  %s1046 = scalar_lea.vmem %s5, 32
  %v1047 = vld [vmem:[%s1046] sm:$0xff]
  %v1048 = vld [vmem:[%s1046 + $0x8] sm:$0xff]
  %1050 = vset.pattern.permute.xlu0 0
  %1051 = vperm.xlu0 %1050, %v1047
  %v1052 = vpop.permute.xlu0 %1051
  %1055 = vset.pattern.permute.xlu0 0
  %1056 = vperm.xlu0 %1055, %v1048
  %v1057 = vpop.permute.xlu0 %1056
  %v1059 = vadd.f32 %v1038, %v1052
  %v1060 = vadd.f32 %v1039, %v1057
  %v1061 = vadd.f32 %v1040, %v1052
  %v1062 = vadd.f32 %v1041, %v1057
  %v1063 = vadd.f32 %v1042, %v1052
  %v1064 = vadd.f32 %v1043, %v1057
  %v1065 = vadd.f32 %v1044, %v1052
  %v1066 = vadd.f32 %v1045, %v1057
  %v1067 = vmax.f32 %v1059, %v1060
  %v1068 = vrot.slane %v1067, 4
  %v1069 = vmax.f32 %v1067, %v1068
  %v1070 = vrot.slane %v1069, 2
  %v1071 = vmax.f32 %v1069, %v1070
  %v1072 = vrot.slane %v1071, 1
  %v1073 = vmax.f32 %v1071, %v1072
  %v1074 = vmax.f32 %v1061, %v1062
  %v1075 = vrot.slane %v1074, 4
  %v1076 = vmax.f32 %v1074, %v1075
  %v1077 = vrot.slane %v1076, 2
  %v1078 = vmax.f32 %v1076, %v1077
  %v1079 = vrot.slane %v1078, 1
  %v1080 = vmax.f32 %v1078, %v1079
  %v1081 = vmax.f32 %v1063, %v1064
  %v1082 = vrot.slane %v1081, 4
  %v1083 = vmax.f32 %v1081, %v1082
  %v1084 = vrot.slane %v1083, 2
  %v1085 = vmax.f32 %v1083, %v1084
  %v1086 = vrot.slane %v1085, 1
  %v1087 = vmax.f32 %v1085, %v1086
  %v1088 = vmax.f32 %v1065, %v1066
  %v1089 = vrot.slane %v1088, 4
  %v1090 = vmax.f32 %v1088, %v1089
  %v1091 = vrot.slane %v1090, 2
  %v1092 = vmax.f32 %v1090, %v1091
  %v1093 = vrot.slane %v1092, 1
  %v1094 = vmax.f32 %v1092, %v1093
  %vm1099 = vcmask 1041409
  %v1100 = vsel %vm1099, %v452, %v445
  %vm1101 = vcmask 1042434
  %v1102 = vsel %vm1101, %v459, %v1100
  %vm1103 = vcmask 1043459
  %v1104 = vsel %vm1103, %v466, %v1102
  %v1110 = vsel %vm1099, %v766, %v759
  %v1111 = vsel %vm1101, %v773, %v1110
  %v1112 = vsel %vm1103, %v780, %v1111
  %v1118 = vsel %vm1099, %v1080, %v1073
  %v1119 = vsel %vm1101, %v1087, %v1118
  %v1120 = vsel %vm1103, %v1094, %v1119
  %v1122 = vld [vmem:[%s8] sm:$0xff]
  %v1123 = vld [vmem:[%s8 + $0x8] sm:$0xff]
  %v1124 = vld [vmem:[%s8 + $0x10] sm:$0xff]
  %v1125 = vld [vmem:[%s8 + $0x18] sm:$0xff]
  %v1126 = vld [vmem:[%s8 + $0x20] sm:$0xff]
  %v1127 = vld [vmem:[%s8 + $0x28] sm:$0xff]
  %v1128 = vld [vmem:[%s8 + $0x30] sm:$0xff]
  %v1129 = vld [vmem:[%s8 + $0x38] sm:$0xff]
  %v1130 = vld [vmem:[%s8 + $0x40] sm:$0xff]
  %v1131 = vld [vmem:[%s8 + $0x48] sm:$0xff]
  %v1132 = vld [vmem:[%s8 + $0x50] sm:$0xff]
  %v1133 = vld [vmem:[%s8 + $0x58] sm:$0xff]
  %v1134 = vld [vmem:[%s8 + $0x60] sm:$0xff]
  %v1135 = vld [vmem:[%s8 + $0x68] sm:$0xff]
  %v1136 = vld [vmem:[%s8 + $0x70] sm:$0xff]
  %v1137 = vld [vmem:[%s8 + $0x78] sm:$0xff]
  %v1138 = vld [vmem:[%s8 + $0x80] sm:$0xff]
  %v1139 = vld [vmem:[%s8 + $0x88] sm:$0xff]
  %v1140 = vld [vmem:[%s8 + $0x90] sm:$0xff]
  %v1141 = vld [vmem:[%s8 + $0x98] sm:$0xff]
  %v1142 = vld [vmem:[%s8 + $0xa0] sm:$0xff]
  %v1143 = vld [vmem:[%s8 + $0xa8] sm:$0xff]
  %v1144 = vld [vmem:[%s8 + $0xb0] sm:$0xff]
  %v1145 = vld [vmem:[%s8 + $0xb8] sm:$0xff]
  %v1146 = vld [vmem:[%s8 + $0xc0] sm:$0xff]
  %v1147 = vld [vmem:[%s8 + $0xc8] sm:$0xff]
  %v1148 = vld [vmem:[%s8 + $0xd0] sm:$0xff]
  %v1149 = vld [vmem:[%s8 + $0xd8] sm:$0xff]
  %v1150 = vld [vmem:[%s8 + $0xe0] sm:$0xff]
  %v1151 = vld [vmem:[%s8 + $0xe8] sm:$0xff]
  %v1152 = vld [vmem:[%s8 + $0xf0] sm:$0xff]
  %v1153 = vld [vmem:[%s8 + $0xf8] sm:$0xff]
  %v1154 = vld [vmem:[%s8 + $0x100] sm:$0xff]
  %v1155 = vld [vmem:[%s8 + $0x108] sm:$0xff]
  %v1156 = vld [vmem:[%s8 + $0x110] sm:$0xff]
  %v1157 = vld [vmem:[%s8 + $0x118] sm:$0xff]
  %v1158 = vld [vmem:[%s8 + $0x120] sm:$0xff]
  %v1159 = vld [vmem:[%s8 + $0x128] sm:$0xff]
  %v1160 = vld [vmem:[%s8 + $0x130] sm:$0xff]
  %v1161 = vld [vmem:[%s8 + $0x138] sm:$0xff]
  %v1162 = vld [vmem:[%s8 + $0x140] sm:$0xff]
  %v1163 = vld [vmem:[%s8 + $0x148] sm:$0xff]
  %v1164 = vld [vmem:[%s8 + $0x150] sm:$0xff]
  %v1165 = vld [vmem:[%s8 + $0x158] sm:$0xff]
  %v1166 = vld [vmem:[%s8 + $0x160] sm:$0xff]
  %v1167 = vld [vmem:[%s8 + $0x168] sm:$0xff]
  %v1168 = vld [vmem:[%s8 + $0x170] sm:$0xff]
  %v1169 = vld [vmem:[%s8 + $0x178] sm:$0xff]
  %v1170 = vld [vmem:[%s9] sm:$0x1]
  %v1172 = vlaneseq
  %v1173 = vshrl.u32 %v1172, 7
  %v1174 = vsub.s32 0, %v1173
  %v1175 = vrot.slane %v1170, %v1174
  %1177 = vmatprep.subr.mxu0 0.0
  %1178 = vmatpush1.msra.mxu0 %v1122
  %1179 = vmatprep.subr.mxu0 0.0
  %1180 = vmatpush1.msra.mxu0 %v1123
  %1181 = vmatprep.subr.mxu0 0.0
  %1182 = vmatpush1.msra.mxu0 %v1124
  %1183 = vmatprep.subr.mxu0 0.0
  %1184 = vmatpush1.msra.mxu0 %v1125
  %1185 = vmatprep.subr.mxu0 0.0
  %1186 = vmatpush1.msra.mxu0 %v1126
  %1187 = vmatprep.subr.mxu0 0.0
  %1188 = vmatpush1.msra.mxu0 %v1127
  %1189 = vmatprep.subr.mxu0 0.0
  %1190 = vmatpush1.msra.mxu0 %v1128
  %1191 = vmatprep.subr.mxu0 0.0
  %1192 = vmatpush1.msra.mxu0 %v1129
  %1193 = vmatprep.subr.mxu0 0.0
  %1194 = vmatpush1.msra.mxu0 %v1130
  %1195 = vmatprep.subr.mxu0 0.0
  %1196 = vmatpush1.msra.mxu0 %v1131
  %1197 = vmatprep.subr.mxu0 0.0
  %1198 = vmatpush1.msra.mxu0 %v1132
  %1199 = vmatprep.subr.mxu0 0.0
  %1200 = vmatpush1.msra.mxu0 %v1133
  %1201 = vmatprep.subr.mxu0 0.0
  %1202 = vmatpush1.msra.mxu0 %v1134
  %1203 = vmatprep.subr.mxu0 0.0
  %1204 = vmatpush1.msra.mxu0 %v1135
  %1205 = vmatprep.subr.mxu0 0.0
  %1206 = vmatpush1.msra.mxu0 %v1136
  %1207 = vmatprep.subr.mxu0 0.0
  %1208 = vmatpush1.msra.mxu0 %v1137
  %1209 = vmatprep.subr.mxu0 0.0
  %1210 = vmatpush1.msra.mxu0 %v1138
  %1211 = vmatprep.subr.mxu0 0.0
  %1212 = vmatpush1.msra.mxu0 %v1139
  %1213 = vmatprep.subr.mxu0 0.0
  %1214 = vmatpush1.msra.mxu0 %v1140
  %1215 = vmatprep.subr.mxu0 0.0
  %1216 = vmatpush1.msra.mxu0 %v1141
  %1217 = vmatprep.subr.mxu0 0.0
  %1218 = vmatpush1.msra.mxu0 %v1142
  %1219 = vmatprep.subr.mxu0 0.0
  %1220 = vmatpush1.msra.mxu0 %v1143
  %1221 = vmatprep.subr.mxu0 0.0
  %1222 = vmatpush1.msra.mxu0 %v1144
  %1223 = vmatprep.subr.mxu0 0.0
  %1224 = vmatpush1.msra.mxu0 %v1145
  %1225 = vmatprep.subr.mxu0 0.0
  %1226 = vmatpush1.msra.mxu0 %v1146
  %1227 = vmatprep.subr.mxu0 0.0
  %1228 = vmatpush1.msra.mxu0 %v1147
  %1229 = vmatprep.subr.mxu0 0.0
  %1230 = vmatpush1.msra.mxu0 %v1148
  %1231 = vmatprep.subr.mxu0 0.0
  %1232 = vmatpush1.msra.mxu0 %v1149
  %1233 = vmatprep.subr.mxu0 0.0
  %1234 = vmatpush1.msra.mxu0 %v1150
  %1235 = vmatprep.subr.mxu0 0.0
  %1236 = vmatpush1.msra.mxu0 %v1151
  %1237 = vmatprep.subr.mxu0 0.0
  %1238 = vmatpush1.msra.mxu0 %v1152
  %1239 = vmatprep.subr.mxu0 0.0
  %1240 = vmatpush1.msra.mxu0 %v1153
  %1241 = vmatprep.mubr.f32.mxu0 %v1112
  %1242 = vmatmul.mubr.f32.gmra.mrb[0].mxu0 %v1104
  %v1243 = vpop.f32.mrb[0].mxu0
  %v1244 = vadd.f32 %v1175, %v1243
  %v1245 = vpop.f32.mrb[0].mxu0
  %1246 = vdwg.mxu0
  %1247 = vmatprep.subr.mxu0 0.0
  %1248 = vmatpush1.msra.mxu0 %v1154
  %1249 = vmatprep.subr.mxu0 0.0
  %1250 = vmatpush1.msra.mxu0 %v1155
  %1251 = vmatprep.subr.mxu0 0.0
  %1252 = vmatpush1.msra.mxu0 %v1156
  %1253 = vmatprep.subr.mxu0 0.0
  %1254 = vmatpush1.msra.mxu0 %v1157
  %1255 = vmatprep.subr.mxu0 0.0
  %1256 = vmatpush1.msra.mxu0 %v1158
  %1257 = vmatprep.subr.mxu0 0.0
  %1258 = vmatpush1.msra.mxu0 %v1159
  %1259 = vmatprep.subr.mxu0 0.0
  %1260 = vmatpush1.msra.mxu0 %v1160
  %1261 = vmatprep.subr.mxu0 0.0
  %1262 = vmatpush1.msra.mxu0 %v1161
  %1263 = vmatprep.subr.mxu0 0.0
  %1264 = vmatpush1.msra.mxu0 %v1162
  %1265 = vmatprep.subr.mxu0 0.0
  %1266 = vmatpush1.msra.mxu0 %v1163
  %1267 = vmatprep.subr.mxu0 0.0
  %1268 = vmatpush1.msra.mxu0 %v1164
  %1269 = vmatprep.subr.mxu0 0.0
  %1270 = vmatpush1.msra.mxu0 %v1165
  %1271 = vmatprep.subr.mxu0 0.0
  %1272 = vmatpush1.msra.mxu0 %v1166
  %1273 = vmatprep.subr.mxu0 0.0
  %1274 = vmatpush1.msra.mxu0 %v1167
  %1275 = vmatprep.subr.mxu0 0.0
  %1276 = vmatpush1.msra.mxu0 %v1168
  %1277 = vmatprep.subr.mxu0 0.0
  %1278 = vmatpush1.msra.mxu0 %v1169
  %1279 = vmatprep.subr.mxu0 0.0
  %1280 = vmatpush1.msra.mxu0 0.0
  %1281 = vmatprep.subr.mxu0 0.0
  %1282 = vmatpush1.msra.mxu0 0.0
  %1283 = vmatprep.subr.mxu0 0.0
  %1284 = vmatpush1.msra.mxu0 0.0
  %1285 = vmatprep.subr.mxu0 0.0
  %1286 = vmatpush1.msra.mxu0 0.0
  %1287 = vmatprep.subr.mxu0 0.0
  %1288 = vmatpush1.msra.mxu0 0.0
  %1289 = vmatprep.subr.mxu0 0.0
  %1290 = vmatpush1.msra.mxu0 0.0
  %1291 = vmatprep.subr.mxu0 0.0
  %1292 = vmatpush1.msra.mxu0 0.0
  %1293 = vmatprep.subr.mxu0 0.0
  %1294 = vmatpush1.msra.mxu0 0.0
  %1295 = vmatprep.subr.mxu0 0.0
  %1296 = vmatpush1.msra.mxu0 0.0
  %1297 = vmatprep.subr.mxu0 0.0
  %1298 = vmatpush1.msra.mxu0 0.0
  %1299 = vmatprep.subr.mxu0 0.0
  %1300 = vmatpush1.msra.mxu0 0.0
  %1301 = vmatprep.subr.mxu0 0.0
  %1302 = vmatpush1.msra.mxu0 0.0
  %1303 = vmatprep.subr.mxu0 0.0
  %1304 = vmatpush1.msra.mxu0 0.0
  %1305 = vmatprep.subr.mxu0 0.0
  %1306 = vmatpush1.msra.mxu0 0.0
  %1307 = vmatprep.subr.mxu0 0.0
  %1308 = vmatpush1.msra.mxu0 0.0
  %1309 = vmatprep.subr.mxu0 0.0
  %1310 = vmatpush1.msra.mxu0 0.0
  %1311 = vmatprep.mubr.f32.mxu0 0.0
  %1312 = vmatmul.mubr.f32.gmra.mrb[0].mxu0 %v1120
  %v1313 = vpop.f32.mrb[0].mxu0
  %v1314 = vadd.f32 %v1244, %v1313
  %v1315 = vpop.f32.mrb[0].mxu0
  %1316 = vdwg.mxu0
  %vm1317 = vcmask 19456
  %v1318 = vsel %vm1317, %v1314, -inf
  %1319 = vmax.xlane.f32.xlu0 %v1318
  %v1320 = vpop.xlane.xlu0 %1319
  %v1321 = vsub.f32 %v1314, %v1320
  %v1322 = vmul.f32 %v1321, 1.442695
  %v1323 = vpow.pop %v1322
  %v1324 = vsel %vm1317, %v1323, 0.0
  %1325 = vadd.xlane.f32.xlu0 %v1324
  %v1326 = vpop.xlane.xlu0 %1325
  %v1327 = vlog2.pop %v1326
  %v1328 = vmul.f32 %v1327, 0.6931472
  %v1329 = vsub.f32 %v1321, %v1328
  %1330 = vst.msk [vmem:[%s10] sm:$0xf] %vm1317, %v1329
  // Predicated region
  $region42: #{forward.1} parent=0 // pred_check
    _
  $region43: #{forward.1} parent=0 // pred_check_branch
    %1332 = sbr.rel (0) target = $region45
  $region44: #{forward.1} parent=0 // pred_region
    _
  $region45: #{forward.1} parent=0 // pred_fallthru
    _
  // Predicated region
  $region46: #{forward.1} parent=0 // pred_check
    _
  $region47: #{forward.1} parent=0 // pred_check_branch
    %1334 = sbr.rel (0) target = $region49
  $region48: #{forward.1} parent=0 // pred_region
    _
  $region49: #{forward.1} parent=0 // pred_fallthru
    _

</llo_original>
